<compile_context>
chip_gen: v7x
topology: tpu7x:2x2x1
jax: 0.10.0
libtpu: 0.0.40
codegen_flags: <defaults>
</compile_context>

<pallas_src>
import functools

import jax
import jax.numpy as jnp
from jax import lax
from jax.experimental import pallas as pl
from jax.experimental.pallas import tpu as pltpu


# ---------------- Pallas kernel ----------------
def _dwsep_kernel(x_ref, top_ref, bot_ref, dw_ref, pw_ref, shift_ref, out_ref,
                  *, TH, W, Cin, Cout, tap_dtype, pw_dtype):
    # x_ref:     (1, TH, W, Cin)  main row tile (auto-pipelined)
    # top_ref:   (1, 1, W, Cin)   halo row above the tile (zeros at image top)
    # bot_ref:   (1, 1, W, Cin)   halo row below the tile (zeros at image bottom)
    # dw_ref:    (3, 3, Cin)      depthwise weights (tap_dtype)
    # pw_ref:    (Cin, Cout)      pointwise weights, BN scale folded (pw_dtype)
    # shift_ref: (1, Cout)        folded BN shift (f32)
    # out_ref:   (1, TH, W, Cout)
    xt = x_ref[0].astype(tap_dtype)            # (TH, W, Cin)
    top = top_ref[0].astype(tap_dtype)         # (1, W, Cin)  row above the tile
    bot = bot_ref[0].astype(tap_dtype)         # (1, W, Cin)  row below the tile

    # kh shift: row slabs holding the row above / at / below every output row.
    # Concatenation is along the major (row) axis -> layout preserving.
    if TH > 1:
        x_up = jnp.concatenate([top, xt[:TH - 1]], axis=0)    # x[r-1]
        x_dn = jnp.concatenate([xt[1:], bot], axis=0)         # x[r+1]
    else:
        x_up, x_dn = top, bot

    # One-column edge masks for the kw = +-1 shifts (zero padding along W).
    col = lax.broadcasted_iota(jnp.int32, (TH, W, Cin), 1)
    first_col = col == 0
    last_col = col == W - 1

    def rowfilt(v, kh):
        # sum_kw v[:, c+kw-1, :] * dw[kh, kw, :]  with zeros outside the image.
        # kw shifts use pltpu.roll (XLU slot) instead of misaligned slices.
        left = jnp.where(first_col, 0, pltpu.roll(v, 1, axis=1))      # c-1 -> c
        right = jnp.where(last_col, 0, pltpu.roll(v, W - 1, axis=1))  # c+1 -> c
        return (left * dw_ref[kh, 0, :] + v * dw_ref[kh, 1, :]
                + right * dw_ref[kh, 2, :])

    # Depthwise 3x3 (stride 1), accumulated in f32 on the VPU.
    acc = (rowfilt(x_up, 0).astype(jnp.float32)
           + rowfilt(xt, 1).astype(jnp.float32)
           + rowfilt(x_dn, 2).astype(jnp.float32))             # (TH, W, Cin)

    # Pointwise 1x1 conv == matmul on the MXU (BN scale already folded into pw).
    # Layout-free reshape when W % 8 == 0 (still correct otherwise).
    lhs = acc.reshape(TH * W, Cin).astype(pw_dtype)
    y = jnp.dot(lhs, pw_ref[...], preferred_element_type=jnp.float32)
    y = jnp.maximum(y + shift_ref[...], 0.0)                   # BN shift + ReLU
    out_ref[0] = y.reshape(TH, W, Cout).astype(out_ref.dtype)


# ---------------- tile / VMEM sizing helpers ----------------
def _round_up(v, m):
    return (v + m - 1) // m * m


def _vmem_budgets(vmem_limit_bytes=None, vmem_budget_bytes=None):
    """Per-generation VMEM limit & tile-picker budget (v7x has 64 MiB / TC)."""
    cap = None
    try:
        cap = getattr(pltpu.get_tpu_info(), "vmem_capacity_bytes", None)
    except Exception:
        cap = None
    if not cap:
        cap = 64 * 1024 * 1024                 # conservative fallback (v7x / TC)
    if vmem_limit_bytes is None:
        # ~40 MiB on 64 MiB parts (v7x), ~100 MiB on 128 MiB parts (v5e/v6e).
        vmem_limit_bytes = max(20 * 2**20, min(cap - 24 * 2**20, int(cap * 0.78)))
    if vmem_budget_bytes is None:
        # head-room for double buffers, layout padding and compiler scratch.
        vmem_budget_bytes = int(vmem_limit_bytes * 0.62)
    return int(vmem_limit_bytes), int(vmem_budget_bytes)


def _est_vmem(th, W, Cin, Cout, in_bytes, out_bytes, tap_bytes, pw_bytes):
    """Conservative per-step VMEM estimate, layout-padded to (8,128) tiles."""
    Wp = _round_up(max(W, 1), 8)
    Cp = _round_up(max(Cin, 1), 128)
    Op = _round_up(max(Cout, 1), 128)
    b = 2 * th * Wp * Cp * in_bytes            # input tile, double buffered
    b += 2 * 2 * Wp * Cp * in_bytes            # two halo rows, double buffered
    b += 2 * th * Wp * Op * out_bytes          # output tile, double buffered
    b += th * Wp * Cp * 4                      # f32 depthwise accumulator
    b += 4 * th * Wp * Cp * tap_bytes          # row slabs + rolled temporaries
    b += th * Wp * Cp * pw_bytes               # matmul LHS
    b += th * Wp * Op * 4                      # f32 matmul result
    b += Cp * Op * pw_bytes + 9 * Cp * tap_bytes + 64 * 1024   # weights / misc
    return b


def _pick_tile_h(H, W, Cin, Cout, *, budget, max_tile_h, min_row_tiles,
                 in_bytes, out_bytes, tap_bytes, pw_bytes):
    """Pick a row-tile height.  Prefers a divisor of H; if H only has tiny
    divisors, returns a non-divisor tile and asks the caller to pad H."""
    cap = min(H, max_tile_h)
    if min_row_tiles > 1 and H >= min_row_tiles:
        cap = min(cap, max(1, H // min_row_tiles))
    cap = max(cap, 1)

    th_fit = 1
    for th in range(1, cap + 1):
        if _est_vmem(th, W, Cin, Cout, in_bytes, out_bytes,
                     tap_bytes, pw_bytes) <= budget:
            th_fit = th
    th_div = 1
    for th in range(1, th_fit + 1):
        if H % th == 0:
            th_div = th
    if 2 * th_div >= th_fit:                   # good divisor exists: no padding
        return th_div, False
    return th_fit, True                        # pad H up to a multiple of th_fit


# ---------------- wrapper ----------------
def dwsep_conv_block(x_nhwc, dw_w, pw_w, gamma, beta, run_mean, run_var,
                     *, kernel_size=3, stride=1, eps=1e-5,
                     out_dtype=None, tap_dtype=jnp.float32,
                     pw_dtype=jnp.bfloat16,
                     max_tile_h=256, vmem_budget_bytes=None,
                     vmem_limit_bytes=None):
    """DepthWiseSeparateConvBlock (2d, k=3, s=1, BN, ReLU; preactivation=False).

    x_nhwc:    (N, H, W, Cin) in NHWC (channels on the TPU lane axis), f32/bf16.
    tap_dtype: compute dtype of the depthwise taps (f32 is safe on every TPU
               generation; pass jnp.bfloat16 on v6e/v7x for VPU bf16 packing).
    pw_dtype:  MXU input dtype of the 1x1 conv (bf16 default; f32 for accuracy).
    Returns (N, H, W, Cout) in out_dtype (defaults to x dtype).
    """
    assert kernel_size == 3 and stride == 1, "kernel implements k=3, stride=1"
    N, H, W, Cin = x_nhwc.shape
    Cout = pw_w.shape[1]
    out_dtype = x_nhwc.dtype if out_dtype is None else out_dtype

    vmem_limit_bytes, vmem_budget_bytes = _vmem_budgets(vmem_limit_bytes,
                                                        vmem_budget_bytes)
    TH, needs_pad = _pick_tile_h(
        H, W, Cin, Cout, budget=vmem_budget_bytes, max_tile_h=max_tile_h,
        min_row_tiles=2 if N < 2 else 1,       # keep both v7x TensorCores busy
        in_bytes=jnp.dtype(x_nhwc.dtype).itemsize,
        out_bytes=jnp.dtype(out_dtype).itemsize,
        tap_bytes=jnp.dtype(tap_dtype).itemsize,
        pw_bytes=jnp.dtype(pw_dtype).itemsize)

    x_in, H_pad = x_nhwc, H
    if needs_pad:                              # awkward H: pad instead of TH->1
        H_pad = _round_up(H, TH)
        x_in = jnp.pad(x_nhwc, ((0, 0), (0, H_pad - H), (0, 0), (0, 0)))
    HT = H_pad // TH

    # Halo rows for the H tiling (boundary tiles get zero rows).  With large TH
    # this re-reads only ~2/TH of the input; no full pad/transpose passes.
    zrow = jnp.zeros((N, 1, W, Cin), dtype=x_in.dtype)
    if HT > 1:
        top_rows = x_in[:, TH - 1::TH][:, :HT - 1]       # rows TH-1, 2TH-1, ...
        bot_rows = x_in[:, TH::TH][:, :HT - 1]           # rows TH, 2TH, ...
        halo_top = jnp.concatenate([zrow, top_rows], axis=1)   # (N, HT, W, Cin)
        halo_bot = jnp.concatenate([bot_rows, zrow], axis=1)   # (N, HT, W, Cin)
    else:
        halo_top = halo_bot = zrow

    # Fold inference BatchNorm: scale into the pointwise weights, shift stays
    # as a per-channel add inside the kernel.
    inv_std = (gamma / jnp.sqrt(run_var + eps)).astype(jnp.float32)
    pw_scaled = (pw_w.astype(jnp.float32) * inv_std[None, :]).astype(pw_dtype)
    shift = (beta - run_mean * inv_std).reshape(1, Cout).astype(jnp.float32)
    dw = dw_w.astype(tap_dtype)                                # (3, 3, Cin)

    kernel = functools.partial(_dwsep_kernel, TH=TH, W=W, Cin=Cin, Cout=Cout,
                               tap_dtype=tap_dtype, pw_dtype=pw_dtype)

    out = pl.pallas_call(
        kernel,
        out_shape=jax.ShapeDtypeStruct((N, H_pad, W, Cout), out_dtype),
        grid_spec=pltpu.PrefetchScalarGridSpec(
            num_scalar_prefetch=0,
            grid=(N, HT),
            in_specs=[
                pl.BlockSpec((1, TH, W, Cin), lambda n, h: (n, h, 0, 0)),
                pl.BlockSpec((1, 1, W, Cin), lambda n, h: (n, h, 0, 0)),
                pl.BlockSpec((1, 1, W, Cin), lambda n, h: (n, h, 0, 0)),
                pl.BlockSpec((3, 3, Cin), lambda n, h: (0, 0, 0)),
                pl.BlockSpec((Cin, Cout), lambda n, h: (0, 0)),
                pl.BlockSpec((1, Cout), lambda n, h: (0, 0)),
            ],
            out_specs=pl.BlockSpec((1, TH, W, Cout), lambda n, h: (n, h, 0, 0)),
        ),
        compiler_params=pltpu.CompilerParams(
            dimension_semantics=("parallel", "parallel"),
            vmem_limit_bytes=int(vmem_limit_bytes),
        ),
    )(x_in, halo_top, halo_bot, dw, pw_scaled, shift)

    return out[:, :H] if needs_pad else out


# ---------------- pure-JAX reference (NHWC) ----------------
def _reference_nhwc(x, dw_w, pw_w, gamma, beta, run_mean, run_var,
                    *, kernel_size=3, stride=1, eps=1e-5):
    N, H, W, Cin = x.shape
    pad = kernel_size - stride
    lo, hi = pad // 2, pad - pad // 2
    dw_hwio = dw_w[:, :, None, :]                          # (KH, KW, 1, Cin)
    y = lax.conv_general_dilated(
        x, dw_hwio, window_strides=(stride, stride),
        padding=((lo, hi), (lo, hi)),
        feature_group_count=Cin,
        dimension_numbers=("NHWC", "HWIO", "NHWC"),
        precision=lax.Precision.HIGHEST)
    pw_hwio = pw_w[None, None, :, :]                       # (1, 1, Cin, Cout)
    y = lax.conv_general_dilated(
        y, pw_hwio, window_strides=(1, 1), padding="VALID",
        dimension_numbers=("NHWC", "HWIO", "NHWC"),
        precision=lax.Precision.HIGHEST)
    scale = gamma / jnp.sqrt(run_var + eps)
    shift = beta - run_mean * scale
    return jnp.maximum(y * scale + shift, 0.0)


if __name__ == "__main__":
    key = jax.random.PRNGKey(0)
    k_x, k_dw, k_pw, k_g, k_b, k_m, k_v = jax.random.split(key, 7)

    # Channel counts sized like the module's ch_in = ch * br so NHWC stays
    # lane-dense; spatial kept small.  W is a multiple of 8 (layout-free reshape).
    N, H, W, Cin, Cout, K = 2, 24, 24, 128, 128, 3

    x = jax.random.normal(k_x, (N, H, W, Cin), dtype=jnp.float32)
    dw_w = jax.random.normal(k_dw, (K, K, Cin), dtype=jnp.float32) * 0.2
    pw_w = jax.random.normal(k_pw, (Cin, Cout), dtype=jnp.float32) * 0.1
    gamma = jax.random.normal(k_g, (Cout,), dtype=jnp.float32) * 0.1 + 1.0
    beta = jax.random.normal(k_b, (Cout,), dtype=jnp.float32) * 0.1
    run_mean = jax.random.normal(k_m, (Cout,), dtype=jnp.float32) * 0.1
    run_var = jnp.abs(jax.random.normal(k_v, (Cout,), dtype=jnp.float32)) + 1.0

    ref = _reference_nhwc(x, dw_w, pw_w, gamma, beta, run_mean, run_var,
                          kernel_size=K, stride=1)

    # 1) default tile picker: one big row tile per image.
    out1 = jax.block_until_ready(
        dwsep_conv_block(x, dw_w, pw_w, gamma, beta, run_mean, run_var))
    assert out1.shape == (N, H, W, Cout)
    assert jnp.allclose(out1, ref, rtol=5e-2, atol=5e-2), "mismatch (single tile)"

    # 2) multi-tile run: exercises interior and boundary halo rows.
    out2 = jax.block_until_ready(
        dwsep_conv_block(x, dw_w, pw_w, gamma, beta, run_mean, run_var,
                         max_tile_h=8))
    assert jnp.allclose(out2, ref, rtol=5e-2, atol=5e-2), "mismatch (tiled)"

    # 3) bf16 input / bf16 output (memory-bound path: halves HBM traffic).
    x_bf16 = x.astype(jnp.bfloat16)
    ref_bf16 = _reference_nhwc(x_bf16.astype(jnp.float32), dw_w, pw_w, gamma,
                               beta, run_mean, run_var, kernel_size=K, stride=1)
    out3 = jax.block_until_ready(
        dwsep_conv_block(x_bf16, dw_w, pw_w, gamma, beta, run_mean, run_var,
                         max_tile_h=8))
    assert out3.dtype == jnp.bfloat16
    assert jnp.allclose(out3.astype(jnp.float32), ref_bf16,
                        rtol=1e-1, atol=1e-1), "mismatch (bf16 I/O)"

    print("KERNEL_OK")
</pallas_src>

<mosaic_0001>
module attributes {stable_mosaic.version = 11 : i64} {
  func.func @_dwsep_kernel(%arg0: i32, %arg1: i32, %arg2: memref<1x24x24x128xf32, #tpu.memory_space<vmem>>, %arg3: memref<1x1x24x128xf32, #tpu.memory_space<vmem>>, %arg4: memref<1x1x24x128xf32, #tpu.memory_space<vmem>>, %arg5: memref<3x3x128xf32, #tpu.memory_space<vmem>>, %arg6: memref<128x128xbf16, #tpu.memory_space<vmem>>, %arg7: memref<1x128xf32, #tpu.memory_space<vmem>>, %arg8: memref<1x24x24x128xf32, #tpu.memory_space<vmem>>) attributes {dimension_semantics = [#tpu.dimension_semantics<parallel>, #tpu.dimension_semantics<parallel>], iteration_bounds = array<i64: 2, 1>, scalar_prefetch = 0 : i64, scratch_operands = 0 : i64, tpu.core_type = #tpu.core_type<tc>, window_params = [{transform_indices = @transform_0, window_bounds = array<i64: 1, 24, 24, 128>}, {transform_indices = @transform_1, window_bounds = array<i64: 1, 1, 24, 128>}, {transform_indices = @transform_2, window_bounds = array<i64: 1, 1, 24, 128>}, {pipeline_mode = #tpu.pipeline_mode<synchronous>, transform_indices = @transform_3, window_bounds = array<i64: 3, 3, 128>}, {pipeline_mode = #tpu.pipeline_mode<synchronous>, transform_indices = @transform_4, window_bounds = array<i64: 128, 128>}, {pipeline_mode = #tpu.pipeline_mode<synchronous>, transform_indices = @transform_5, window_bounds = array<i64: 1, 128>}, {transform_indices = @transform_6, window_bounds = array<i64: 1, 24, 24, 128>}]} {
    %c0 = arith.constant 0 : index
    %c0_0 = arith.constant 0 : index
    %c0_1 = arith.constant 0 : index
    %c0_2 = arith.constant 0 : index
    %0 = vector.load %arg2[%c0, %c0_0, %c0_1, %c0_2] : memref<1x24x24x128xf32, #tpu.memory_space<vmem>>, vector<1x24x24x128xf32>
    %1 = vector.shape_cast %0 : vector<1x24x24x128xf32> to vector<24x24x128xf32>
    %c0_3 = arith.constant 0 : index
    %c0_4 = arith.constant 0 : index
    %c0_5 = arith.constant 0 : index
    %c0_6 = arith.constant 0 : index
    %2 = vector.load %arg3[%c0_3, %c0_4, %c0_5, %c0_6] : memref<1x1x24x128xf32, #tpu.memory_space<vmem>>, vector<1x1x24x128xf32>
    %3 = vector.shape_cast %2 : vector<1x1x24x128xf32> to vector<1x24x128xf32>
    %c0_7 = arith.constant 0 : index
    %c0_8 = arith.constant 0 : index
    %c0_9 = arith.constant 0 : index
    %c0_10 = arith.constant 0 : index
    %4 = vector.load %arg4[%c0_7, %c0_8, %c0_9, %c0_10] : memref<1x1x24x128xf32, #tpu.memory_space<vmem>>, vector<1x1x24x128xf32>
    %5 = vector.shape_cast %4 : vector<1x1x24x128xf32> to vector<1x24x128xf32>
    %6 = vector.extract_strided_slice %1 {offsets = [0, 0, 0], sizes = [23, 24, 128], strides = [1, 1, 1]} : vector<24x24x128xf32> to vector<23x24x128xf32>
    %7 = tpu.concatenate %3, %6 in 0 : vector<1x24x128xf32>, vector<23x24x128xf32> -> vector<24x24x128xf32>
    %8 = vector.extract_strided_slice %1 {offsets = [1, 0, 0], sizes = [23, 24, 128], strides = [1, 1, 1]} : vector<24x24x128xf32> to vector<23x24x128xf32>
    %9 = tpu.concatenate %8, %5 in 0 : vector<23x24x128xf32>, vector<1x24x128xf32> -> vector<24x24x128xf32>
    %10 = tpu.iota {dimensions = array<i32: 1>} : vector<24x24x128xi32>
    %c0_i32 = arith.constant 0 : i32
    %11 = vector.broadcast %c0_i32 : i32 to vector<24x24x128xi32>
    %12 = arith.cmpi eq, %10, %11 : vector<24x24x128xi32>
    %c23_i32 = arith.constant 23 : i32
    %13 = vector.broadcast %c23_i32 : i32 to vector<24x24x128xi32>
    %14 = arith.cmpi eq, %10, %13 : vector<24x24x128xi32>
    %c1_i32 = arith.constant 1 : i32
    %15 = tpu.dynamic_rotate %7 by %c1_i32 dim 1 : vector<24x24x128xf32>, i32 -> vector<24x24x128xf32>
    %c0_i32_11 = arith.constant 0 : i32
    %16 = arith.sitofp %c0_i32_11 : i32 to f32
    %17 = vector.broadcast %16 : f32 to vector<24x24x128xf32>
    %18 = arith.select %12, %17, %15 : vector<24x24x128xi1>, vector<24x24x128xf32>
    %c23_i32_12 = arith.constant 23 : i32
    %19 = tpu.dynamic_rotate %7 by %c23_i32_12 dim 1 : vector<24x24x128xf32>, i32 -> vector<24x24x128xf32>
    %c0_i32_13 = arith.constant 0 : i32
    %20 = arith.sitofp %c0_i32_13 : i32 to f32
    %21 = vector.broadcast %20 : f32 to vector<24x24x128xf32>
    %22 = arith.select %14, %21, %19 : vector<24x24x128xi1>, vector<24x24x128xf32>
    %c0_14 = arith.constant 0 : index
    %c0_15 = arith.constant 0 : index
    %c0_16 = arith.constant 0 : index
    %23 = vector.load %arg5[%c0_14, %c0_15, %c0_16] : memref<3x3x128xf32, #tpu.memory_space<vmem>>, vector<1x1x128xf32>
    %24 = vector.shape_cast %23 : vector<1x1x128xf32> to vector<128xf32>
    %25 = vector.shape_cast %24 : vector<128xf32> to vector<1x1x128xf32>
    %26 = vector.broadcast %25 : vector<1x1x128xf32> to vector<24x24x128xf32>
    %27 = arith.mulf %18, %26 : vector<24x24x128xf32>
    %c0_17 = arith.constant 0 : index
    %c1 = arith.constant 1 : index
    %c0_18 = arith.constant 0 : index
    %28 = vector.load %arg5[%c0_17, %c1, %c0_18] : memref<3x3x128xf32, #tpu.memory_space<vmem>>, vector<1x1x128xf32>
    %29 = vector.shape_cast %28 : vector<1x1x128xf32> to vector<128xf32>
    %30 = vector.shape_cast %29 : vector<128xf32> to vector<1x1x128xf32>
    %31 = vector.broadcast %30 : vector<1x1x128xf32> to vector<24x24x128xf32>
    %32 = arith.mulf %7, %31 : vector<24x24x128xf32>
    %33 = arith.addf %27, %32 : vector<24x24x128xf32>
    %c0_19 = arith.constant 0 : index
    %c2 = arith.constant 2 : index
    %c0_20 = arith.constant 0 : index
    %34 = vector.load %arg5[%c0_19, %c2, %c0_20] : memref<3x3x128xf32, #tpu.memory_space<vmem>>, vector<1x1x128xf32>
    %35 = vector.shape_cast %34 : vector<1x1x128xf32> to vector<128xf32>
    %36 = vector.shape_cast %35 : vector<128xf32> to vector<1x1x128xf32>
    %37 = vector.broadcast %36 : vector<1x1x128xf32> to vector<24x24x128xf32>
    %38 = arith.mulf %22, %37 : vector<24x24x128xf32>
    %39 = arith.addf %33, %38 : vector<24x24x128xf32>
    %c1_i32_21 = arith.constant 1 : i32
    %40 = tpu.dynamic_rotate %1 by %c1_i32_21 dim 1 : vector<24x24x128xf32>, i32 -> vector<24x24x128xf32>
    %c0_i32_22 = arith.constant 0 : i32
    %41 = arith.sitofp %c0_i32_22 : i32 to f32
    %42 = vector.broadcast %41 : f32 to vector<24x24x128xf32>
    %43 = arith.select %12, %42, %40 : vector<24x24x128xi1>, vector<24x24x128xf32>
    %c23_i32_23 = arith.constant 23 : i32
    %44 = tpu.dynamic_rotate %1 by %c23_i32_23 dim 1 : vector<24x24x128xf32>, i32 -> vector<24x24x128xf32>
    %c0_i32_24 = arith.constant 0 : i32
    %45 = arith.sitofp %c0_i32_24 : i32 to f32
    %46 = vector.broadcast %45 : f32 to vector<24x24x128xf32>
    %47 = arith.select %14, %46, %44 : vector<24x24x128xi1>, vector<24x24x128xf32>
    %c1_25 = arith.constant 1 : index
    %c0_26 = arith.constant 0 : index
    %c0_27 = arith.constant 0 : index
    %48 = vector.load %arg5[%c1_25, %c0_26, %c0_27] : memref<3x3x128xf32, #tpu.memory_space<vmem>>, vector<1x1x128xf32>
    %49 = vector.shape_cast %48 : vector<1x1x128xf32> to vector<128xf32>
    %50 = vector.shape_cast %49 : vector<128xf32> to vector<1x1x128xf32>
    %51 = vector.broadcast %50 : vector<1x1x128xf32> to vector<24x24x128xf32>
    %52 = arith.mulf %43, %51 : vector<24x24x128xf32>
    %c1_28 = arith.constant 1 : index
    %c1_29 = arith.constant 1 : index
    %c0_30 = arith.constant 0 : index
    %53 = vector.load %arg5[%c1_28, %c1_29, %c0_30] : memref<3x3x128xf32, #tpu.memory_space<vmem>>, vector<1x1x128xf32>
    %54 = vector.shape_cast %53 : vector<1x1x128xf32> to vector<128xf32>
    %55 = vector.shape_cast %54 : vector<128xf32> to vector<1x1x128xf32>
    %56 = vector.broadcast %55 : vector<1x1x128xf32> to vector<24x24x128xf32>
    %57 = arith.mulf %1, %56 : vector<24x24x128xf32>
    %58 = arith.addf %52, %57 : vector<24x24x128xf32>
    %c1_31 = arith.constant 1 : index
    %c2_32 = arith.constant 2 : index
    %c0_33 = arith.constant 0 : index
    %59 = vector.load %arg5[%c1_31, %c2_32, %c0_33] : memref<3x3x128xf32, #tpu.memory_space<vmem>>, vector<1x1x128xf32>
    %60 = vector.shape_cast %59 : vector<1x1x128xf32> to vector<128xf32>
    %61 = vector.shape_cast %60 : vector<128xf32> to vector<1x1x128xf32>
    %62 = vector.broadcast %61 : vector<1x1x128xf32> to vector<24x24x128xf32>
    %63 = arith.mulf %47, %62 : vector<24x24x128xf32>
    %64 = arith.addf %58, %63 : vector<24x24x128xf32>
    %65 = arith.addf %39, %64 : vector<24x24x128xf32>
    %c1_i32_34 = arith.constant 1 : i32
    %66 = tpu.dynamic_rotate %9 by %c1_i32_34 dim 1 : vector<24x24x128xf32>, i32 -> vector<24x24x128xf32>
    %c0_i32_35 = arith.constant 0 : i32
    %67 = arith.sitofp %c0_i32_35 : i32 to f32
    %68 = vector.broadcast %67 : f32 to vector<24x24x128xf32>
    %69 = arith.select %12, %68, %66 : vector<24x24x128xi1>, vector<24x24x128xf32>
    %c23_i32_36 = arith.constant 23 : i32
    %70 = tpu.dynamic_rotate %9 by %c23_i32_36 dim 1 : vector<24x24x128xf32>, i32 -> vector<24x24x128xf32>
    %c0_i32_37 = arith.constant 0 : i32
    %71 = arith.sitofp %c0_i32_37 : i32 to f32
    %72 = vector.broadcast %71 : f32 to vector<24x24x128xf32>
    %73 = arith.select %14, %72, %70 : vector<24x24x128xi1>, vector<24x24x128xf32>
    %c2_38 = arith.constant 2 : index
    %c0_39 = arith.constant 0 : index
    %c0_40 = arith.constant 0 : index
    %74 = vector.load %arg5[%c2_38, %c0_39, %c0_40] : memref<3x3x128xf32, #tpu.memory_space<vmem>>, vector<1x1x128xf32>
    %75 = vector.shape_cast %74 : vector<1x1x128xf32> to vector<128xf32>
    %76 = vector.shape_cast %75 : vector<128xf32> to vector<1x1x128xf32>
    %77 = vector.broadcast %76 : vector<1x1x128xf32> to vector<24x24x128xf32>
    %78 = arith.mulf %69, %77 : vector<24x24x128xf32>
    %c2_41 = arith.constant 2 : index
    %c1_42 = arith.constant 1 : index
    %c0_43 = arith.constant 0 : index
    %79 = vector.load %arg5[%c2_41, %c1_42, %c0_43] : memref<3x3x128xf32, #tpu.memory_space<vmem>>, vector<1x1x128xf32>
    %80 = vector.shape_cast %79 : vector<1x1x128xf32> to vector<128xf32>
    %81 = vector.shape_cast %80 : vector<128xf32> to vector<1x1x128xf32>
    %82 = vector.broadcast %81 : vector<1x1x128xf32> to vector<24x24x128xf32>
    %83 = arith.mulf %9, %82 : vector<24x24x128xf32>
    %84 = arith.addf %78, %83 : vector<24x24x128xf32>
    %c2_44 = arith.constant 2 : index
    %c2_45 = arith.constant 2 : index
    %c0_46 = arith.constant 0 : index
    %85 = vector.load %arg5[%c2_44, %c2_45, %c0_46] : memref<3x3x128xf32, #tpu.memory_space<vmem>>, vector<1x1x128xf32>
    %86 = vector.shape_cast %85 : vector<1x1x128xf32> to vector<128xf32>
    %87 = vector.shape_cast %86 : vector<128xf32> to vector<1x1x128xf32>
    %88 = vector.broadcast %87 : vector<1x1x128xf32> to vector<24x24x128xf32>
    %89 = arith.mulf %73, %88 : vector<24x24x128xf32>
    %90 = arith.addf %84, %89 : vector<24x24x128xf32>
    %91 = arith.addf %65, %90 : vector<24x24x128xf32>
    %92 = vector.shape_cast %91 : vector<24x24x128xf32> to vector<576x128xf32>
    %93 = arith.truncf %92 : vector<576x128xf32> to vector<576x128xbf16>
    %c0_47 = arith.constant 0 : index
    %c0_48 = arith.constant 0 : index
    %94 = vector.load %arg6[%c0_47, %c0_48] : memref<128x128xbf16, #tpu.memory_space<vmem>>, vector<128x128xbf16>
    %cst = arith.constant dense<0.000000e+00> : vector<576x128xf32>
    %95 = tpu.matmul %93, %94, %cst {dimension_numbers = #tpu.dot_dimension_numbers<[1], [0], [0], [1], [0, 0, 1, 1], [], []>} : vector<576x128xbf16>, vector<128x128xbf16>, vector<576x128xf32> -> vector<576x128xf32>
    %c0_49 = arith.constant 0 : index
    %c0_50 = arith.constant 0 : index
    %96 = vector.load %arg7[%c0_49, %c0_50] : memref<1x128xf32, #tpu.memory_space<vmem>>, vector<1x128xf32>
    %97 = vector.broadcast %96 : vector<1x128xf32> to vector<576x128xf32>
    %98 = arith.addf %95, %97 : vector<576x128xf32>
    %cst_51 = arith.constant 0.000000e+00 : f32
    %99 = vector.broadcast %cst_51 : f32 to vector<576x128xf32>
    %100 = arith.maximumf %98, %99 : vector<576x128xf32>
    %101 = vector.shape_cast %100 : vector<576x128xf32> to vector<24x24x128xf32>
    %c0_52 = arith.constant 0 : index
    %c0_53 = arith.constant 0 : index
    %c0_54 = arith.constant 0 : index
    %c0_55 = arith.constant 0 : index
    %102 = vector.load %arg8[%c0_52, %c0_53, %c0_54, %c0_55] : memref<1x24x24x128xf32, #tpu.memory_space<vmem>>, vector<1x24x24x128xf32>
    %103 = vector.shape_cast %102 : vector<1x24x24x128xf32> to vector<24x24x128xf32>
    %104 = vector.shape_cast %101 : vector<24x24x128xf32> to vector<1x24x24x128xf32>
    tpu.vector_store %arg8[%c0_52, %c0_53, %c0_54, %c0_55], %104 {strides = array<i32>} : memref<1x24x24x128xf32, #tpu.memory_space<vmem>>, vector<1x24x24x128xf32>,
    return
  }
  func.func @transform_0(%arg0: i32, %arg1: i32) -> (i32, i32, i32, i32) {
    %c0_i32 = arith.constant 0 : i32
    %c0_i32_0 = arith.constant 0 : i32
    %c0_i32_1 = arith.constant 0 : i32
    return %arg0, %arg1, %c0_i32, %c0_i32_0 : i32, i32, i32, i32
  }
  func.func @transform_1(%arg0: i32, %arg1: i32) -> (i32, i32, i32, i32) {
    %c0_i32 = arith.constant 0 : i32
    %c0_i32_0 = arith.constant 0 : i32
    %c0_i32_1 = arith.constant 0 : i32
    return %arg0, %arg1, %c0_i32, %c0_i32_0 : i32, i32, i32, i32
  }
  func.func @transform_2(%arg0: i32, %arg1: i32) -> (i32, i32, i32, i32) {
    %c0_i32 = arith.constant 0 : i32
    %c0_i32_0 = arith.constant 0 : i32
    %c0_i32_1 = arith.constant 0 : i32
    return %arg0, %arg1, %c0_i32, %c0_i32_0 : i32, i32, i32, i32
  }
  func.func @transform_3(%arg0: i32, %arg1: i32) -> (i32, i32, i32) {
    %c0_i32 = arith.constant 0 : i32
    %c0_i32_0 = arith.constant 0 : i32
    %c0_i32_1 = arith.constant 0 : i32
    %c0_i32_2 = arith.constant 0 : i32
    return %c0_i32, %c0_i32_0, %c0_i32_1 : i32, i32, i32
  }
  func.func @transform_4(%arg0: i32, %arg1: i32) -> (i32, i32) {
    %c0_i32 = arith.constant 0 : i32
    %c0_i32_0 = arith.constant 0 : i32
    %c0_i32_1 = arith.constant 0 : i32
    return %c0_i32, %c0_i32_0 : i32, i32
  }
  func.func @transform_5(%arg0: i32, %arg1: i32) -> (i32, i32) {
    %c0_i32 = arith.constant 0 : i32
    %c0_i32_0 = arith.constant 0 : i32
    %c0_i32_1 = arith.constant 0 : i32
    return %c0_i32, %c0_i32_0 : i32, i32
  }
  func.func @transform_6(%arg0: i32, %arg1: i32) -> (i32, i32, i32, i32) {
    %c0_i32 = arith.constant 0 : i32
    %c0_i32_0 = arith.constant 0 : i32
    %c0_i32_1 = arith.constant 0 : i32
    return %arg0, %arg1, %c0_i32, %c0_i32_0 : i32, i32, i32, i32
  }
}

</mosaic_0001>

<llo_original>
// kernel: tpu_custom_call.1
$region0: #{tpu_custom_call.1}
  #allocation0 [shape = 'u32[]', space=smem, size = 0x4, offset = 0x4, fixed_abs, tag = 'smem constant byte address 0x4 - core index']
  #allocation1 [shape = 'u32[144,128]{1,0:T(1,128)}', space=vmem, size = 0x12000, scoped, tag = 'internal scratch']
  %s0 = inlined_call_operand.hbm [shape: f32[2,24,24,128], index: 0, kind: input, shape index: {}]
  %s1 = inlined_call_operand.hbm [shape: f32[2,1,24,128], index: 1, kind: input, shape index: {}]
  %s2 = inlined_call_operand.hbm [shape: f32[2,1,24,128], index: 2, kind: input, shape index: {}]
  %s3 = inlined_call_operand.hbm [shape: f32[3,3,128], index: 3, kind: input, shape index: {}]
  %s4 = inlined_call_operand.hbm [shape: bf16[128,128], index: 4, kind: input, shape index: {}]
  %s5 = inlined_call_operand.vmem [shape: f32[1,128], index: 5, kind: input, shape index: {}]
  %s6 = inlined_call_operand.hbm [shape: f32[2,24,24,128], index: 6, kind: output, shape index: {}]
  %s7 = sld [smem:[#allocation0]]
  $region77: #{tpu_custom_call.1} parent=0
    _
  %s9 = ssub.s32 1, %s7
  %s10 = scalar_select 0, %s9, %s7
  $region1: #{tpu_custom_call.1} parent=0
    #allocation2 [shape = 'u8[589824]{0}', space=vmem, size = 0x90000, scoped, tag = 'input window, operand 0']
    #allocation3 [shape = 's32[2]{0}', space=sflag, size = 0x8, scoped, tag = 'scoped memory for tpu_custom_call.1']
    #allocation4 [shape = 's32[2]{0}', space=sflag, size = 0x8, scoped, tag = 'scoped memory for tpu_custom_call.1']
    #allocation5 [shape = 'u8[24576]{0}', space=vmem, size = 0x6000, scoped, tag = 'input window, operand 1']
    #allocation6 [shape = 's32[2]{0}', space=sflag, size = 0x8, scoped, tag = 'scoped memory for tpu_custom_call.1']
    #allocation7 [shape = 'u8[24576]{0}', space=vmem, size = 0x6000, scoped, tag = 'input window, operand 2']
    #allocation8 [shape = 'u8[6144]{0}', space=vmem, size = 0x1800, scoped, tag = 'input window, operand 3, single buffered']
    #allocation9 [shape = 's32[1]{0}', space=sflag, size = 0x4, scoped, tag = 'scoped memory for tpu_custom_call.1']
    #allocation10 [shape = 'u8[32768]{0}', space=vmem, size = 0x8000, scoped, tag = 'input window, operand 4, single buffered']
    #allocation11 [shape = 'u8[589824]{0}', space=vmem, size = 0x90000, scoped, tag = 'output window, operand 0']
    %11 = vsyncpa [#allocation3], 0
    %s12 = scalar_lea.sflag [#allocation3], 1
    %13 = vsyncpa %s12, 0
    %14 = vsyncpa [#allocation6], 0
    %s15 = scalar_lea.sflag [#allocation6], 1
    %16 = vsyncpa %s15, 0
    %17 = vsyncpa [#allocation9], 0
    %18 = vsyncpa [#allocation4], 0
    %s19 = scalar_lea.sflag [#allocation4], 1
    %20 = vsyncpa %s19, 0
    loop: start=0, step=1, limit=4
    $region2: #{tpu_custom_call.1} parent=1 // loop_pre_header
      _
    $region3: #{tpu_custom_call.1} parent=1 // loop_header
      %s22 = sphi 0, %s26
      %p23 = scmp.ge.s32.totalorder %s22, 4
      %s29 = sphi 0, %s41
      %s30 = sphi 0, %s37
      %s31 = sphi 0, %s29
      %s32 = sphi 0, %s30
      %s33 = sphi 0, %s31
      %s34 = sphi 0, %s32
      %s46 = sphi 0, %s48
      %s49 = sphi 0, %s46
      %s50 = sphi 0, %s49
      %s66 = sphi 0, %s50
      %s74 = sphi 0, %s76
      %s77 = sphi 0, %s74
      %s78 = sphi 0, %s77
      %s94 = sphi 0, %s78
      %s102 = sphi 0, %s104
      %s105 = sphi 0, %s102
      %s106 = sphi 0, %s105
      %s122 = sphi 0, %s106
      %s126 = sphi 0, %s126
      %s128 = sphi 0, %s126
      %s129 = sphi 0, %s128
      %s143 = sphi 0, %s129
      %s147 = sphi 0, %s147
      %s149 = sphi 0, %s147
      %s150 = sphi 0, %s149
      %s164 = sphi 0, %s150
      %s168 = sphi 0, %s168
      %s170 = sphi 0, %s168
      %s171 = sphi 0, %s170
      %s185 = sphi 0, %s171
      %s193 = sphi 0, %s195
      %s196 = sphi 0, %s193
      %s197 = sphi 0, %s196
      %s213 = sphi 0, %s197
    $region4: #{tpu_custom_call.1} parent=1 // loop_header_branch
      %25 = sbr.rel (%p23) target = $region8
    $region5: #{tpu_custom_call.1} parent=1 // loop_body
      %s27 = ssub.s32 %s22, 1
      %s28 = ssub.s32 %s22, 2
      %s35 = sadd.s32 1, %s30
      %p36 = scmp.ge.s32.totalorder %s35, 1
      %s37 = scalar_select %p36, 0, %s35
      %s38 = sadd.s32 1, %s29
      %s39 = scalar_select %p36, %s38, %s29
      %p40 = scmp.ge.s32.totalorder %s39, 2
      %s41 = scalar_select %p40, 0, %s39
      %s42 = ssub.s32 %s29, %s41
      %s43 = ssub.s32 %s30, %s37
      %s44 = sor.u32 %s42, %s43
      %p45 = scmp.eq.s32.totalorder %s44, 0
      %s47 = sadd.s32 %s46, 1
      %s48 = scalar_select %p45, %s46, %s47
      %p51 = pneg %p45
      %p52 = scmp.eq.s32.totalorder %s22, 1
      %p53 = por %p51, %p52
      %p54 = scmp.ne.s32.totalorder %s46, %s49
      %p55 = scmp.eq.s32.totalorder %s22, 0
      %p56 = por %p54, %p55
      %p57 = scmp.ne.s32.totalorder %s46, %s49
      %p58 = scmp.eq.s32.totalorder %s27, 1
      %p59 = por %p57, %p58
      %p60 = scmp.ne.s32.totalorder %s49, %s50
      %p61 = scmp.eq.s32.totalorder %s27, 0
      %p62 = por %p60, %p61
      %p63 = scmp.ne.s32.totalorder %s49, %s50
      %p64 = scmp.eq.s32.totalorder %s28, 1
      %p65 = por %p63, %p64
      %p67 = scmp.ne.s32.totalorder %s50, %s66
      %p68 = scmp.eq.s32.totalorder %s28, 0
      %p69 = por %p67, %p68
      %s70 = ssub.s32 %s29, %s41
      %s71 = ssub.s32 %s30, %s37
      %s72 = sor.u32 %s70, %s71
      %p73 = scmp.eq.s32.totalorder %s72, 0
      %s75 = sadd.s32 %s74, 1
      %s76 = scalar_select %p73, %s74, %s75
      %p79 = pneg %p73
      %p80 = scmp.eq.s32.totalorder %s22, 1
      %p81 = por %p79, %p80
      %p82 = scmp.ne.s32.totalorder %s74, %s77
      %p83 = scmp.eq.s32.totalorder %s22, 0
      %p84 = por %p82, %p83
      %p85 = scmp.ne.s32.totalorder %s74, %s77
      %p86 = scmp.eq.s32.totalorder %s27, 1
      %p87 = por %p85, %p86
      %p88 = scmp.ne.s32.totalorder %s77, %s78
      %p89 = scmp.eq.s32.totalorder %s27, 0
      %p90 = por %p88, %p89
      %p91 = scmp.ne.s32.totalorder %s77, %s78
      %p92 = scmp.eq.s32.totalorder %s28, 1
      %p93 = por %p91, %p92
      %p95 = scmp.ne.s32.totalorder %s78, %s94
      %p96 = scmp.eq.s32.totalorder %s28, 0
      %p97 = por %p95, %p96
      %s98 = ssub.s32 %s29, %s41
      %s99 = ssub.s32 %s30, %s37
      %s100 = sor.u32 %s98, %s99
      %p101 = scmp.eq.s32.totalorder %s100, 0
      %s103 = sadd.s32 %s102, 1
      %s104 = scalar_select %p101, %s102, %s103
      %p107 = pneg %p101
      %p108 = scmp.eq.s32.totalorder %s22, 1
      %p109 = por %p107, %p108
      %p110 = scmp.ne.s32.totalorder %s102, %s105
      %p111 = scmp.eq.s32.totalorder %s22, 0
      %p112 = por %p110, %p111
      %p113 = scmp.ne.s32.totalorder %s102, %s105
      %p114 = scmp.eq.s32.totalorder %s27, 1
      %p115 = por %p113, %p114
      %p116 = scmp.ne.s32.totalorder %s105, %s106
      %p117 = scmp.eq.s32.totalorder %s27, 0
      %p118 = por %p116, %p117
      %p119 = scmp.ne.s32.totalorder %s105, %s106
      %p120 = scmp.eq.s32.totalorder %s28, 1
      %p121 = por %p119, %p120
      %p123 = scmp.ne.s32.totalorder %s106, %s122
      %p124 = scmp.eq.s32.totalorder %s28, 0
      %p125 = por %p123, %p124
      %s127 = sadd.s32 %s126, 1
      %p130 = scmp.eq.s32.totalorder %s22, 1
      %p131 = scmp.ne.s32.totalorder %s126, %s128
      %p132 = scmp.eq.s32.totalorder %s22, 0
      %p133 = por %p131, %p132
      %p134 = scmp.ne.s32.totalorder %s126, %s128
      %p135 = scmp.eq.s32.totalorder %s27, 1
      %p136 = por %p134, %p135
      %p137 = scmp.ne.s32.totalorder %s128, %s129
      %p138 = scmp.eq.s32.totalorder %s27, 0
      %p139 = por %p137, %p138
      %p140 = scmp.ne.s32.totalorder %s128, %s129
      %p141 = scmp.eq.s32.totalorder %s28, 1
      %p142 = por %p140, %p141
      %p144 = scmp.ne.s32.totalorder %s129, %s143
      %p145 = scmp.eq.s32.totalorder %s28, 0
      %p146 = por %p144, %p145
      %s148 = sadd.s32 %s147, 1
      %p151 = scmp.eq.s32.totalorder %s22, 1
      %p152 = scmp.ne.s32.totalorder %s147, %s149
      %p153 = scmp.eq.s32.totalorder %s22, 0
      %p154 = por %p152, %p153
      %p155 = scmp.ne.s32.totalorder %s147, %s149
      %p156 = scmp.eq.s32.totalorder %s27, 1
      %p157 = por %p155, %p156
      %p158 = scmp.ne.s32.totalorder %s149, %s150
      %p159 = scmp.eq.s32.totalorder %s27, 0
      %p160 = por %p158, %p159
      %p161 = scmp.ne.s32.totalorder %s149, %s150
      %p162 = scmp.eq.s32.totalorder %s28, 1
      %p163 = por %p161, %p162
      %p165 = scmp.ne.s32.totalorder %s150, %s164
      %p166 = scmp.eq.s32.totalorder %s28, 0
      %p167 = por %p165, %p166
      %s169 = sadd.s32 %s168, 1
      %p172 = scmp.eq.s32.totalorder %s22, 1
      %p173 = scmp.ne.s32.totalorder %s168, %s170
      %p174 = scmp.eq.s32.totalorder %s22, 0
      %p175 = por %p173, %p174
      %p176 = scmp.ne.s32.totalorder %s168, %s170
      %p177 = scmp.eq.s32.totalorder %s27, 1
      %p178 = por %p176, %p177
      %p179 = scmp.ne.s32.totalorder %s170, %s171
      %p180 = scmp.eq.s32.totalorder %s27, 0
      %p181 = por %p179, %p180
      %p182 = scmp.ne.s32.totalorder %s170, %s171
      %p183 = scmp.eq.s32.totalorder %s28, 1
      %p184 = por %p182, %p183
      %p186 = scmp.ne.s32.totalorder %s171, %s185
      %p187 = scmp.eq.s32.totalorder %s28, 0
      %p188 = por %p186, %p187
      %s189 = ssub.s32 %s29, %s41
      %s190 = ssub.s32 %s30, %s37
      %s191 = sor.u32 %s189, %s190
      %p192 = scmp.eq.s32.totalorder %s191, 0
      %s194 = sadd.s32 %s193, 1
      %s195 = scalar_select %p192, %s193, %s194
      %p198 = pneg %p192
      %p199 = scmp.eq.s32.totalorder %s22, 1
      %p200 = por %p198, %p199
      %p201 = scmp.ne.s32.totalorder %s193, %s196
      %p202 = scmp.eq.s32.totalorder %s22, 0
      %p203 = por %p201, %p202
      %p204 = scmp.ne.s32.totalorder %s193, %s196
      %p205 = scmp.eq.s32.totalorder %s27, 1
      %p206 = por %p204, %p205
      %p207 = scmp.ne.s32.totalorder %s196, %s197
      %p208 = scmp.eq.s32.totalorder %s27, 0
      %p209 = por %p207, %p208
      %p210 = scmp.ne.s32.totalorder %s196, %s197
      %p211 = scmp.eq.s32.totalorder %s28, 1
      %p212 = por %p210, %p211
      %p214 = scmp.ne.s32.totalorder %s197, %s213
      %p215 = scmp.eq.s32.totalorder %s28, 0
      %p216 = por %p214, %p215
      %p217 = scmp.le.s32.totalorder 1, %s22
      %p218 = scmp.lt.s32.totalorder %s22, 3
      %p219 = pnand %p217, %p218
      %p220 = pneg %p219
      // Predicated region
      $region9: #{tpu_custom_call.1} parent=5 // pred_check
        _
      $region10: #{tpu_custom_call.1} parent=5 // pred_check_branch
        %222 = sbr.rel (%p219) target = $region12
      $region11: #{tpu_custom_call.1} parent=5 // pred_region
        %s223 = ssub.s32 %s22, 1
        // Predicated region
        $region13: #{tpu_custom_call.1} parent=11 // pred_check
          %p224 = pneg %p139
        $region14: #{tpu_custom_call.1} parent=11 // pred_check_branch
          %226 = sbr.rel (%p224) target = $region16
        $region15: #{tpu_custom_call.1} parent=11 // pred_region
          %s228 = ssub.s32 192, 192
          %229 = vsyncadd [#allocation9], %s228
          %s230 = sshll.u32 [#allocation8], 4
          %s231 = int_to_ptr.vmem [resolvable:$true] %s230
          %236 = dma.hbm_to_vmem [thread:$0]  %s3, 192, %s231, [#allocation9], 64, 64, 4
        $region16: #{tpu_custom_call.1} parent=11 // pred_fallthru
          _
        // Predicated region
        $region17: #{tpu_custom_call.1} parent=11 // pred_check
          %p237 = pneg %p160
        $region18: #{tpu_custom_call.1} parent=11 // pred_check_branch
          %239 = sbr.rel (%p237) target = $region20
        $region19: #{tpu_custom_call.1} parent=11 // pred_region
          %s241 = ssub.s32 1024, 1024
          %242 = vsyncadd [#allocation9], %s241
          %s243 = sshll.u32 [#allocation10], 4
          %s244 = int_to_ptr.vmem [resolvable:$true] %s243
          %249 = dma.hbm_to_vmem [thread:$0]  %s4, 1024, %s244, [#allocation9], 64, 64, 4
        $region20: #{tpu_custom_call.1} parent=11 // pred_fallthru
          _
        // Predicated region
        $region21: #{tpu_custom_call.1} parent=11 // pred_check
          %p250 = pneg %p181
        $region22: #{tpu_custom_call.1} parent=11 // pred_check_branch
          %252 = sbr.rel (%p250) target = $region24
        $region23: #{tpu_custom_call.1} parent=11 // pred_region
          _
        $region24: #{tpu_custom_call.1} parent=11 // pred_fallthru
          _
      $region12: #{tpu_custom_call.1} parent=5 // pred_fallthru
        _
      %p253 = scmp.lt.s32.totalorder %s22, 2
      // Predicated region
      $region25: #{tpu_custom_call.1} parent=5 // pred_check
        %p254 = pneg %p253
      $region26: #{tpu_custom_call.1} parent=5 // pred_check_branch
        %256 = sbr.rel (%p254) target = $region28
      $region27: #{tpu_custom_call.1} parent=5 // pred_region
        // Predicated region
        $region29: #{tpu_custom_call.1} parent=27 // pred_check
          %p257 = pneg %p56
        $region30: #{tpu_custom_call.1} parent=27 // pred_check_branch
          %259 = sbr.rel (%p257) target = $region32
        $region31: #{tpu_custom_call.1} parent=27 // pred_region
          %s260 = sand.u32 %s46, 1
          %s261 = scalar_lea.sflag [#allocation3], %s260
          %s262 = sand.u32 %s46, 1
          %s263 = smul.addr %s262, 576
          %s264 = scalar_lea.vmem [#allocation2], %s263
          %s265 = smul.u32 24, %s30
          %s267 = ssub.s32 9216, 9216
          %268 = vsyncadd %s261, %s267
          %s269 = smul.addr %s265, 3
          %s270 = smul.addr %s29, 72
          %s271 = sadd.s32 %s269, %s270
          %s272 = smul.addr %s271, 128
          %s273 = scalar_lea.hbm %s0, %s272
          %s274 = sshll.u32 %s264, 4
          %s275 = int_to_ptr.vmem [resolvable:$true] %s274
          %280 = dma.hbm_to_vmem [thread:$0]  %s273, 9216, %s275, %s261, 128, 128, 8
        $region32: #{tpu_custom_call.1} parent=27 // pred_fallthru
          _
        // Predicated region
        $region33: #{tpu_custom_call.1} parent=27 // pred_check
          %p281 = pneg %p84
        $region34: #{tpu_custom_call.1} parent=27 // pred_check_branch
          %283 = sbr.rel (%p281) target = $region36
        $region35: #{tpu_custom_call.1} parent=27 // pred_region
          %s284 = sand.u32 %s22, 1
          %s285 = scalar_lea.sflag [#allocation6], %s284
          %s286 = sand.u32 %s74, 1
          %s287 = smul.addr %s286, 24
          %s288 = scalar_lea.vmem [#allocation5], %s287
          %s290 = ssub.s32 384, 384
          %291 = vsyncadd %s285, %s290
          %s292 = smul.addr %s30, 3
          %s293 = smul.addr %s29, 3
          %s294 = sadd.s32 %s292, %s293
          %s295 = smul.addr %s294, 128
          %s296 = scalar_lea.hbm %s1, %s295
          %s297 = sshll.u32 %s288, 4
          %s298 = int_to_ptr.vmem [resolvable:$true] %s297
          %303 = dma.hbm_to_vmem [thread:$0]  %s296, 384, %s298, %s285, 128, 128, 8
        $region36: #{tpu_custom_call.1} parent=27 // pred_fallthru
          _
        // Predicated region
        $region37: #{tpu_custom_call.1} parent=27 // pred_check
          %p304 = pneg %p112
        $region38: #{tpu_custom_call.1} parent=27 // pred_check_branch
          %306 = sbr.rel (%p304) target = $region40
        $region39: #{tpu_custom_call.1} parent=27 // pred_region
          %s307 = sand.u32 %s22, 1
          %s308 = scalar_lea.sflag [#allocation6], %s307
          %s309 = sand.u32 %s102, 1
          %s310 = smul.addr %s309, 24
          %s311 = scalar_lea.vmem [#allocation7], %s310
          %s313 = ssub.s32 384, 384
          %314 = vsyncadd %s308, %s313
          %s315 = smul.addr %s30, 3
          %s316 = smul.addr %s29, 3
          %s317 = sadd.s32 %s315, %s316
          %s318 = smul.addr %s317, 128
          %s319 = scalar_lea.hbm %s2, %s318
          %s320 = sshll.u32 %s311, 4
          %s321 = int_to_ptr.vmem [resolvable:$true] %s320
          %326 = dma.hbm_to_vmem [thread:$0]  %s319, 384, %s321, %s308, 128, 128, 8
        $region40: #{tpu_custom_call.1} parent=27 // pred_fallthru
          _
      $region28: #{tpu_custom_call.1} parent=5 // pred_fallthru
        _
      %p327 = scmp.le.s32.totalorder 1, %s22
      %p328 = scmp.lt.s32.totalorder %s22, 3
      %p329 = pnand %p327, %p328
      %p330 = pneg %p329
      // Predicated region
      $region41: #{tpu_custom_call.1} parent=5 // pred_check
        _
      $region42: #{tpu_custom_call.1} parent=5 // pred_check_branch
        %332 = sbr.rel (%p329) target = $region44
      $region43: #{tpu_custom_call.1} parent=5 // pred_region
        %s333 = ssub.s32 %s22, 1
        %s334 = sand.u32 %s49, 1
        %s335 = scalar_lea.sflag [#allocation3], %s334
        %s336 = sand.u32 %s49, 1
        %s337 = smul.addr %s336, 576
        %s338 = scalar_lea.vmem [#allocation2], %s337
        // Predicated region
        $region45: #{tpu_custom_call.1} parent=43 // pred_check
          %p339 = pneg %p62
        $region46: #{tpu_custom_call.1} parent=43 // pred_check_branch
          %341 = sbr.rel (%p339) target = $region48
        $region47: #{tpu_custom_call.1} parent=43 // pred_region
          %342 = dma.done %s335, 9216
        $region48: #{tpu_custom_call.1} parent=43 // pred_fallthru
          _
        %s343 = sand.u32 %s27, 1
        %s344 = scalar_lea.sflag [#allocation6], %s343
        %s345 = sand.u32 %s77, 1
        %s346 = smul.addr %s345, 24
        %s347 = scalar_lea.vmem [#allocation5], %s346
        // Predicated region
        $region49: #{tpu_custom_call.1} parent=43 // pred_check
          %p348 = pneg %p90
        $region50: #{tpu_custom_call.1} parent=43 // pred_check_branch
          %350 = sbr.rel (%p348) target = $region52
        $region51: #{tpu_custom_call.1} parent=43 // pred_region
          %351 = dma.done %s344, 384
        $region52: #{tpu_custom_call.1} parent=43 // pred_fallthru
          _
        %s352 = sand.u32 %s27, 1
        %s353 = scalar_lea.sflag [#allocation6], %s352
        %s354 = sand.u32 %s105, 1
        %s355 = smul.addr %s354, 24
        %s356 = scalar_lea.vmem [#allocation7], %s355
        // Predicated region
        $region53: #{tpu_custom_call.1} parent=43 // pred_check
          %p357 = pneg %p118
        $region54: #{tpu_custom_call.1} parent=43 // pred_check_branch
          %359 = sbr.rel (%p357) target = $region56
        $region55: #{tpu_custom_call.1} parent=43 // pred_region
          %360 = dma.done %s353, 384
        $region56: #{tpu_custom_call.1} parent=43 // pred_fallthru
          _
        // Predicated region
        $region57: #{tpu_custom_call.1} parent=43 // pred_check
          %p361 = pneg %p139
        $region58: #{tpu_custom_call.1} parent=43 // pred_check_branch
          %363 = sbr.rel (%p361) target = $region60
        $region59: #{tpu_custom_call.1} parent=43 // pred_region
          %364 = dma.done [#allocation9], 192
        $region60: #{tpu_custom_call.1} parent=43 // pred_fallthru
          _
        // Predicated region
        $region61: #{tpu_custom_call.1} parent=43 // pred_check
          %p365 = pneg %p160
        $region62: #{tpu_custom_call.1} parent=43 // pred_check_branch
          %367 = sbr.rel (%p365) target = $region64
        $region63: #{tpu_custom_call.1} parent=43 // pred_region
          %368 = dma.done [#allocation9], 1024
        $region64: #{tpu_custom_call.1} parent=43 // pred_fallthru
          _
        %s369 = sand.u32 %s49, 1
        %s370 = scalar_lea.sflag [#allocation3], %s369
        %s371 = sand.u32 %s49, 1
        %s372 = smul.addr %s371, 576
        %s373 = scalar_lea.vmem [#allocation2], %s372
        %p374 = pneg %p62
        %p375 = pneg %p59
        %s376 = sand.u32 %s27, 1
        %s377 = scalar_lea.sflag [#allocation6], %s376
        %s378 = sand.u32 %s77, 1
        %s379 = smul.addr %s378, 24
        %s380 = scalar_lea.vmem [#allocation5], %s379
        %p381 = pneg %p90
        %p382 = pneg %p87
        %s383 = sand.u32 %s27, 1
        %s384 = scalar_lea.sflag [#allocation6], %s383
        %s385 = sand.u32 %s105, 1
        %s386 = smul.addr %s385, 24
        %s387 = scalar_lea.vmem [#allocation7], %s386
        %p388 = pneg %p118
        %p389 = pneg %p115
        %p390 = pneg %p139
        %p391 = pneg %p136
        %p392 = pneg %p160
        %p393 = pneg %p157
        %p394 = pneg %p181
        %p395 = pneg %p178
        %p396 = pneg %p209
        %p397 = pneg %p206
        %s398 = sand.u32 %s196, 1
        %s399 = scalar_lea.sflag [#allocation4], %s398
        %s400 = sand.u32 %s196, 1
        %s401 = smul.addr %s400, 576
        %s402 = scalar_lea.vmem [#allocation11], %s401
        %s403 = smul.u32 24, %s32
        %s404 = smul.u32 24, %s32
        %v406 = vld [vmem:[%s338] sm:$0xff]
        %v407 = vld [vmem:[%s338 + $0x8] sm:$0xff]
        %v408 = vld [vmem:[%s338 + $0x10] sm:$0xff]
        %v409 = vld [vmem:[%s338 + $0x18] sm:$0xff]
        %v410 = vld [vmem:[%s338 + $0x20] sm:$0xff]
        %v411 = vld [vmem:[%s338 + $0x28] sm:$0xff]
        %v412 = vld [vmem:[%s338 + $0x30] sm:$0xff]
        %v413 = vld [vmem:[%s338 + $0x38] sm:$0xff]
        %v414 = vld [vmem:[%s338 + $0x40] sm:$0xff]
        %v415 = vld [vmem:[%s338 + $0x48] sm:$0xff]
        %v416 = vld [vmem:[%s338 + $0x50] sm:$0xff]
        %v417 = vld [vmem:[%s338 + $0x58] sm:$0xff]
        %v418 = vld [vmem:[%s338 + $0x60] sm:$0xff]
        %v419 = vld [vmem:[%s338 + $0x68] sm:$0xff]
        %v420 = vld [vmem:[%s338 + $0x70] sm:$0xff]
        %v421 = vld [vmem:[%s338 + $0x78] sm:$0xff]
        %v422 = vld [vmem:[%s338 + $0x80] sm:$0xff]
        %v423 = vld [vmem:[%s338 + $0x88] sm:$0xff]
        %v424 = vld [vmem:[%s338 + $0x90] sm:$0xff]
        %v425 = vld [vmem:[%s338 + $0x98] sm:$0xff]
        %v426 = vld [vmem:[%s338 + $0xa0] sm:$0xff]
        %v427 = vld [vmem:[%s338 + $0xa8] sm:$0xff]
        %v428 = vld [vmem:[%s338 + $0xb0] sm:$0xff]
        %v429 = vld [vmem:[%s338 + $0xb8] sm:$0xff]
        %v430 = vld [vmem:[%s338 + $0xc0] sm:$0xff]
        %v431 = vld [vmem:[%s338 + $0xc8] sm:$0xff]
        %v432 = vld [vmem:[%s338 + $0xd0] sm:$0xff]
        %v433 = vld [vmem:[%s338 + $0xd8] sm:$0xff]
        %v434 = vld [vmem:[%s338 + $0xe0] sm:$0xff]
        %v435 = vld [vmem:[%s338 + $0xe8] sm:$0xff]
        %v436 = vld [vmem:[%s338 + $0xf0] sm:$0xff]
        %v437 = vld [vmem:[%s338 + $0xf8] sm:$0xff]
        %v438 = vld [vmem:[%s338 + $0x100] sm:$0xff]
        %v439 = vld [vmem:[%s338 + $0x108] sm:$0xff]
        %v440 = vld [vmem:[%s338 + $0x110] sm:$0xff]
        %v441 = vld [vmem:[%s338 + $0x118] sm:$0xff]
        %v442 = vld [vmem:[%s338 + $0x120] sm:$0xff]
        %v443 = vld [vmem:[%s338 + $0x128] sm:$0xff]
        %v444 = vld [vmem:[%s338 + $0x130] sm:$0xff]
        %v445 = vld [vmem:[%s338 + $0x138] sm:$0xff]
        %v446 = vld [vmem:[%s338 + $0x140] sm:$0xff]
        %v447 = vld [vmem:[%s338 + $0x148] sm:$0xff]
        %v448 = vld [vmem:[%s338 + $0x150] sm:$0xff]
        %v449 = vld [vmem:[%s338 + $0x158] sm:$0xff]
        %v450 = vld [vmem:[%s338 + $0x160] sm:$0xff]
        %v451 = vld [vmem:[%s338 + $0x168] sm:$0xff]
        %v452 = vld [vmem:[%s338 + $0x170] sm:$0xff]
        %v453 = vld [vmem:[%s338 + $0x178] sm:$0xff]
        %v454 = vld [vmem:[%s338 + $0x180] sm:$0xff]
        %v455 = vld [vmem:[%s338 + $0x188] sm:$0xff]
        %v456 = vld [vmem:[%s338 + $0x190] sm:$0xff]
        %v457 = vld [vmem:[%s338 + $0x198] sm:$0xff]
        %v458 = vld [vmem:[%s338 + $0x1a0] sm:$0xff]
        %v459 = vld [vmem:[%s338 + $0x1a8] sm:$0xff]
        %v460 = vld [vmem:[%s338 + $0x1b0] sm:$0xff]
        %v461 = vld [vmem:[%s338 + $0x1b8] sm:$0xff]
        %v462 = vld [vmem:[%s338 + $0x1c0] sm:$0xff]
        %v463 = vld [vmem:[%s338 + $0x1c8] sm:$0xff]
        %v464 = vld [vmem:[%s338 + $0x1d0] sm:$0xff]
        %v465 = vld [vmem:[%s338 + $0x1d8] sm:$0xff]
        %v466 = vld [vmem:[%s338 + $0x1e0] sm:$0xff]
        %v467 = vld [vmem:[%s338 + $0x1e8] sm:$0xff]
        %v468 = vld [vmem:[%s338 + $0x1f0] sm:$0xff]
        %v469 = vld [vmem:[%s338 + $0x1f8] sm:$0xff]
        %v470 = vld [vmem:[%s338 + $0x200] sm:$0xff]
        %v471 = vld [vmem:[%s338 + $0x208] sm:$0xff]
        %v472 = vld [vmem:[%s338 + $0x210] sm:$0xff]
        %v473 = vld [vmem:[%s338 + $0x218] sm:$0xff]
        %v474 = vld [vmem:[%s338 + $0x220] sm:$0xff]
        %v475 = vld [vmem:[%s338 + $0x228] sm:$0xff]
        %v476 = vld [vmem:[%s338 + $0x230] sm:$0xff]
        %v477 = vld [vmem:[%s338 + $0x238] sm:$0xff]
        %v478 = vld [vmem:[%s347] sm:$0xff]
        %v479 = vld [vmem:[%s347 + $0x8] sm:$0xff]
        %v480 = vld [vmem:[%s347 + $0x10] sm:$0xff]
        %v481 = vld [vmem:[%s356] sm:$0xff]
        %v482 = vld [vmem:[%s356 + $0x8] sm:$0xff]
        %v483 = vld [vmem:[%s356 + $0x10] sm:$0xff]
        %v484 = vlaneseq
        %v485 = vshrl.u32 %v484, 7
        %v486 = vadd.s32 %v485, 8
        %v487 = vadd.s32 %v485, 16
        %vm488 = vcmp.eq.s32.totalorder %v485, 0
        %vm489 = vcmp.eq.s32.totalorder %v486, 0
        %vm490 = vcmp.eq.s32.totalorder %v487, 0
        %vm491 = vcmp.eq.s32.totalorder %v485, 23
        %vm492 = vcmp.eq.s32.totalorder %v486, 23
        %vm493 = vcmp.eq.s32.totalorder %v487, 23
        %v494 = vrot.slane %v478, 7
        %v495 = vrot.slane %v406, 7
        %v496 = vrot.slane %v409, 7
        %v497 = vrot.slane %v412, 7
        %v498 = vrot.slane %v415, 7
        %v499 = vrot.slane %v418, 7
        %v500 = vrot.slane %v421, 7
        %v501 = vrot.slane %v424, 7
        %v502 = vrot.slane %v427, 7
        %v503 = vrot.slane %v430, 7
        %v504 = vrot.slane %v433, 7
        %v505 = vrot.slane %v436, 7
        %v506 = vrot.slane %v439, 7
        %v507 = vrot.slane %v442, 7
        %v508 = vrot.slane %v445, 7
        %v509 = vrot.slane %v448, 7
        %v510 = vrot.slane %v451, 7
        %v511 = vrot.slane %v454, 7
        %v512 = vrot.slane %v457, 7
        %v513 = vrot.slane %v460, 7
        %v514 = vrot.slane %v463, 7
        %v515 = vrot.slane %v466, 7
        %v516 = vrot.slane %v469, 7
        %v517 = vrot.slane %v472, 7
        %v518 = vrot.slane %v479, 7
        %v519 = vrot.slane %v407, 7
        %v520 = vrot.slane %v410, 7
        %v521 = vrot.slane %v413, 7
        %v522 = vrot.slane %v416, 7
        %v523 = vrot.slane %v419, 7
        %v524 = vrot.slane %v422, 7
        %v525 = vrot.slane %v425, 7
        %v526 = vrot.slane %v428, 7
        %v527 = vrot.slane %v431, 7
        %v528 = vrot.slane %v434, 7
        %v529 = vrot.slane %v437, 7
        %v530 = vrot.slane %v440, 7
        %v531 = vrot.slane %v443, 7
        %v532 = vrot.slane %v446, 7
        %v533 = vrot.slane %v449, 7
        %v534 = vrot.slane %v452, 7
        %v535 = vrot.slane %v455, 7
        %v536 = vrot.slane %v458, 7
        %v537 = vrot.slane %v461, 7
        %v538 = vrot.slane %v464, 7
        %v539 = vrot.slane %v467, 7
        %v540 = vrot.slane %v470, 7
        %v541 = vrot.slane %v473, 7
        %v542 = vrot.slane %v480, 7
        %v543 = vrot.slane %v408, 7
        %v544 = vrot.slane %v411, 7
        %v545 = vrot.slane %v414, 7
        %v546 = vrot.slane %v417, 7
        %v547 = vrot.slane %v420, 7
        %v548 = vrot.slane %v423, 7
        %v549 = vrot.slane %v426, 7
        %v550 = vrot.slane %v429, 7
        %v551 = vrot.slane %v432, 7
        %v552 = vrot.slane %v435, 7
        %v553 = vrot.slane %v438, 7
        %v554 = vrot.slane %v441, 7
        %v555 = vrot.slane %v444, 7
        %v556 = vrot.slane %v447, 7
        %v557 = vrot.slane %v450, 7
        %v558 = vrot.slane %v453, 7
        %v559 = vrot.slane %v456, 7
        %v560 = vrot.slane %v459, 7
        %v561 = vrot.slane %v462, 7
        %v562 = vrot.slane %v465, 7
        %v563 = vrot.slane %v468, 7
        %v564 = vrot.slane %v471, 7
        %v565 = vrot.slane %v474, 7
        %vm566 = vcmp.lt.s32.totalorder %v485, 1
        %v567 = vsel %vm566, %v518, %v542
        %v568 = vsel %vm566, %v519, %v543
        %v569 = vsel %vm566, %v520, %v544
        %v570 = vsel %vm566, %v521, %v545
        %v571 = vsel %vm566, %v522, %v546
        %v572 = vsel %vm566, %v523, %v547
        %v573 = vsel %vm566, %v524, %v548
        %v574 = vsel %vm566, %v525, %v549
        %v575 = vsel %vm566, %v526, %v550
        %v576 = vsel %vm566, %v527, %v551
        %v577 = vsel %vm566, %v528, %v552
        %v578 = vsel %vm566, %v529, %v553
        %v579 = vsel %vm566, %v530, %v554
        %v580 = vsel %vm566, %v531, %v555
        %v581 = vsel %vm566, %v532, %v556
        %v582 = vsel %vm566, %v533, %v557
        %v583 = vsel %vm566, %v534, %v558
        %v584 = vsel %vm566, %v535, %v559
        %v585 = vsel %vm566, %v536, %v560
        %v586 = vsel %vm566, %v537, %v561
        %v587 = vsel %vm566, %v538, %v562
        %v588 = vsel %vm566, %v539, %v563
        %v589 = vsel %vm566, %v540, %v564
        %v590 = vsel %vm566, %v541, %v565
        %v591 = vsel %vm566, %v494, %v518
        %v592 = vsel %vm566, %v495, %v519
        %v593 = vsel %vm566, %v496, %v520
        %v594 = vsel %vm566, %v497, %v521
        %v595 = vsel %vm566, %v498, %v522
        %v596 = vsel %vm566, %v499, %v523
        %v597 = vsel %vm566, %v500, %v524
        %v598 = vsel %vm566, %v501, %v525
        %v599 = vsel %vm566, %v502, %v526
        %v600 = vsel %vm566, %v503, %v527
        %v601 = vsel %vm566, %v504, %v528
        %v602 = vsel %vm566, %v505, %v529
        %v603 = vsel %vm566, %v506, %v530
        %v604 = vsel %vm566, %v507, %v531
        %v605 = vsel %vm566, %v508, %v532
        %v606 = vsel %vm566, %v509, %v533
        %v607 = vsel %vm566, %v510, %v534
        %v608 = vsel %vm566, %v511, %v535
        %v609 = vsel %vm566, %v512, %v536
        %v610 = vsel %vm566, %v513, %v537
        %v611 = vsel %vm566, %v514, %v538
        %v612 = vsel %vm566, %v515, %v539
        %v613 = vsel %vm566, %v516, %v540
        %v614 = vsel %vm566, %v517, %v541
        %v615 = vsel %vm566, %v542, %v494
        %v616 = vsel %vm566, %v543, %v495
        %v617 = vsel %vm566, %v544, %v496
        %v618 = vsel %vm566, %v545, %v497
        %v619 = vsel %vm566, %v546, %v498
        %v620 = vsel %vm566, %v547, %v499
        %v621 = vsel %vm566, %v548, %v500
        %v622 = vsel %vm566, %v549, %v501
        %v623 = vsel %vm566, %v550, %v502
        %v624 = vsel %vm566, %v551, %v503
        %v625 = vsel %vm566, %v552, %v504
        %v626 = vsel %vm566, %v553, %v505
        %v627 = vsel %vm566, %v554, %v506
        %v628 = vsel %vm566, %v555, %v507
        %v629 = vsel %vm566, %v556, %v508
        %v630 = vsel %vm566, %v557, %v509
        %v631 = vsel %vm566, %v558, %v510
        %v632 = vsel %vm566, %v559, %v511
        %v633 = vsel %vm566, %v560, %v512
        %v634 = vsel %vm566, %v561, %v513
        %v635 = vsel %vm566, %v562, %v514
        %v636 = vsel %vm566, %v563, %v515
        %v637 = vsel %vm566, %v564, %v516
        %v638 = vsel %vm566, %v565, %v517
        %v639 = vsel %vm488, 0.0, %v615
        %v640 = vsel %vm489, 0.0, %v591
        %v641 = vsel %vm490, 0.0, %v567
        %v642 = vsel %vm488, 0.0, %v616
        %v643 = vsel %vm489, 0.0, %v592
        %v644 = vsel %vm490, 0.0, %v568
        %v645 = vsel %vm488, 0.0, %v617
        %v646 = vsel %vm489, 0.0, %v593
        %v647 = vsel %vm490, 0.0, %v569
        %v648 = vsel %vm488, 0.0, %v618
        %v649 = vsel %vm489, 0.0, %v594
        %v650 = vsel %vm490, 0.0, %v570
        %v651 = vsel %vm488, 0.0, %v619
        %v652 = vsel %vm489, 0.0, %v595
        %v653 = vsel %vm490, 0.0, %v571
        %v654 = vsel %vm488, 0.0, %v620
        %v655 = vsel %vm489, 0.0, %v596
        %v656 = vsel %vm490, 0.0, %v572
        %v657 = vsel %vm488, 0.0, %v621
        %v658 = vsel %vm489, 0.0, %v597
        %v659 = vsel %vm490, 0.0, %v573
        %v660 = vsel %vm488, 0.0, %v622
        %v661 = vsel %vm489, 0.0, %v598
        %v662 = vsel %vm490, 0.0, %v574
        %v663 = vsel %vm488, 0.0, %v623
        %v664 = vsel %vm489, 0.0, %v599
        %v665 = vsel %vm490, 0.0, %v575
        %v666 = vsel %vm488, 0.0, %v624
        %v667 = vsel %vm489, 0.0, %v600
        %v668 = vsel %vm490, 0.0, %v576
        %v669 = vsel %vm488, 0.0, %v625
        %v670 = vsel %vm489, 0.0, %v601
        %v671 = vsel %vm490, 0.0, %v577
        %v672 = vsel %vm488, 0.0, %v626
        %v673 = vsel %vm489, 0.0, %v602
        %v674 = vsel %vm490, 0.0, %v578
        %v675 = vsel %vm488, 0.0, %v627
        %v676 = vsel %vm489, 0.0, %v603
        %v677 = vsel %vm490, 0.0, %v579
        %v678 = vsel %vm488, 0.0, %v628
        %v679 = vsel %vm489, 0.0, %v604
        %v680 = vsel %vm490, 0.0, %v580
        %v681 = vsel %vm488, 0.0, %v629
        %v682 = vsel %vm489, 0.0, %v605
        %v683 = vsel %vm490, 0.0, %v581
        %v684 = vsel %vm488, 0.0, %v630
        %v685 = vsel %vm489, 0.0, %v606
        %v686 = vsel %vm490, 0.0, %v582
        %v687 = vsel %vm488, 0.0, %v631
        %v688 = vsel %vm489, 0.0, %v607
        %v689 = vsel %vm490, 0.0, %v583
        %v690 = vsel %vm488, 0.0, %v632
        %v691 = vsel %vm489, 0.0, %v608
        %v692 = vsel %vm490, 0.0, %v584
        %v693 = vsel %vm488, 0.0, %v633
        %v694 = vsel %vm489, 0.0, %v609
        %v695 = vsel %vm490, 0.0, %v585
        %v696 = vsel %vm488, 0.0, %v634
        %v697 = vsel %vm489, 0.0, %v610
        %v698 = vsel %vm490, 0.0, %v586
        %v699 = vsel %vm488, 0.0, %v635
        %v700 = vsel %vm489, 0.0, %v611
        %v701 = vsel %vm490, 0.0, %v587
        %v702 = vsel %vm488, 0.0, %v636
        %v703 = vsel %vm489, 0.0, %v612
        %v704 = vsel %vm490, 0.0, %v588
        %v705 = vsel %vm488, 0.0, %v637
        %v706 = vsel %vm489, 0.0, %v613
        %v707 = vsel %vm490, 0.0, %v589
        %v708 = vsel %vm488, 0.0, %v638
        %v709 = vsel %vm489, 0.0, %v614
        %v710 = vsel %vm490, 0.0, %v590
        %v711 = vrot.slane %v478, 1
        %v712 = vrot.slane %v406, 1
        %v713 = vrot.slane %v409, 1
        %v714 = vrot.slane %v412, 1
        %v715 = vrot.slane %v415, 1
        %v716 = vrot.slane %v418, 1
        %v717 = vrot.slane %v421, 1
        %v718 = vrot.slane %v424, 1
        %v719 = vrot.slane %v427, 1
        %v720 = vrot.slane %v430, 1
        %v721 = vrot.slane %v433, 1
        %v722 = vrot.slane %v436, 1
        %v723 = vrot.slane %v439, 1
        %v724 = vrot.slane %v442, 1
        %v725 = vrot.slane %v445, 1
        %v726 = vrot.slane %v448, 1
        %v727 = vrot.slane %v451, 1
        %v728 = vrot.slane %v454, 1
        %v729 = vrot.slane %v457, 1
        %v730 = vrot.slane %v460, 1
        %v731 = vrot.slane %v463, 1
        %v732 = vrot.slane %v466, 1
        %v733 = vrot.slane %v469, 1
        %v734 = vrot.slane %v472, 1
        %v735 = vrot.slane %v479, 1
        %v736 = vrot.slane %v407, 1
        %v737 = vrot.slane %v410, 1
        %v738 = vrot.slane %v413, 1
        %v739 = vrot.slane %v416, 1
        %v740 = vrot.slane %v419, 1
        %v741 = vrot.slane %v422, 1
        %v742 = vrot.slane %v425, 1
        %v743 = vrot.slane %v428, 1
        %v744 = vrot.slane %v431, 1
        %v745 = vrot.slane %v434, 1
        %v746 = vrot.slane %v437, 1
        %v747 = vrot.slane %v440, 1
        %v748 = vrot.slane %v443, 1
        %v749 = vrot.slane %v446, 1
        %v750 = vrot.slane %v449, 1
        %v751 = vrot.slane %v452, 1
        %v752 = vrot.slane %v455, 1
        %v753 = vrot.slane %v458, 1
        %v754 = vrot.slane %v461, 1
        %v755 = vrot.slane %v464, 1
        %v756 = vrot.slane %v467, 1
        %v757 = vrot.slane %v470, 1
        %v758 = vrot.slane %v473, 1
        %v759 = vrot.slane %v480, 1
        %v760 = vrot.slane %v408, 1
        %v761 = vrot.slane %v411, 1
        %v762 = vrot.slane %v414, 1
        %v763 = vrot.slane %v417, 1
        %v764 = vrot.slane %v420, 1
        %v765 = vrot.slane %v423, 1
        %v766 = vrot.slane %v426, 1
        %v767 = vrot.slane %v429, 1
        %v768 = vrot.slane %v432, 1
        %v769 = vrot.slane %v435, 1
        %v770 = vrot.slane %v438, 1
        %v771 = vrot.slane %v441, 1
        %v772 = vrot.slane %v444, 1
        %v773 = vrot.slane %v447, 1
        %v774 = vrot.slane %v450, 1
        %v775 = vrot.slane %v453, 1
        %v776 = vrot.slane %v456, 1
        %v777 = vrot.slane %v459, 1
        %v778 = vrot.slane %v462, 1
        %v779 = vrot.slane %v465, 1
        %v780 = vrot.slane %v468, 1
        %v781 = vrot.slane %v471, 1
        %v782 = vrot.slane %v474, 1
        %vm783 = vcmp.lt.s32.totalorder %v485, 7
        %v784 = vsel %vm783, %v735, %v759
        %v785 = vsel %vm783, %v736, %v760
        %v786 = vsel %vm783, %v737, %v761
        %v787 = vsel %vm783, %v738, %v762
        %v788 = vsel %vm783, %v739, %v763
        %v789 = vsel %vm783, %v740, %v764
        %v790 = vsel %vm783, %v741, %v765
        %v791 = vsel %vm783, %v742, %v766
        %v792 = vsel %vm783, %v743, %v767
        %v793 = vsel %vm783, %v744, %v768
        %v794 = vsel %vm783, %v745, %v769
        %v795 = vsel %vm783, %v746, %v770
        %v796 = vsel %vm783, %v747, %v771
        %v797 = vsel %vm783, %v748, %v772
        %v798 = vsel %vm783, %v749, %v773
        %v799 = vsel %vm783, %v750, %v774
        %v800 = vsel %vm783, %v751, %v775
        %v801 = vsel %vm783, %v752, %v776
        %v802 = vsel %vm783, %v753, %v777
        %v803 = vsel %vm783, %v754, %v778
        %v804 = vsel %vm783, %v755, %v779
        %v805 = vsel %vm783, %v756, %v780
        %v806 = vsel %vm783, %v757, %v781
        %v807 = vsel %vm783, %v758, %v782
        %v808 = vsel %vm783, %v711, %v735
        %v809 = vsel %vm783, %v712, %v736
        %v810 = vsel %vm783, %v713, %v737
        %v811 = vsel %vm783, %v714, %v738
        %v812 = vsel %vm783, %v715, %v739
        %v813 = vsel %vm783, %v716, %v740
        %v814 = vsel %vm783, %v717, %v741
        %v815 = vsel %vm783, %v718, %v742
        %v816 = vsel %vm783, %v719, %v743
        %v817 = vsel %vm783, %v720, %v744
        %v818 = vsel %vm783, %v721, %v745
        %v819 = vsel %vm783, %v722, %v746
        %v820 = vsel %vm783, %v723, %v747
        %v821 = vsel %vm783, %v724, %v748
        %v822 = vsel %vm783, %v725, %v749
        %v823 = vsel %vm783, %v726, %v750
        %v824 = vsel %vm783, %v727, %v751
        %v825 = vsel %vm783, %v728, %v752
        %v826 = vsel %vm783, %v729, %v753
        %v827 = vsel %vm783, %v730, %v754
        %v828 = vsel %vm783, %v731, %v755
        %v829 = vsel %vm783, %v732, %v756
        %v830 = vsel %vm783, %v733, %v757
        %v831 = vsel %vm783, %v734, %v758
        %v832 = vsel %vm783, %v759, %v711
        %v833 = vsel %vm783, %v760, %v712
        %v834 = vsel %vm783, %v761, %v713
        %v835 = vsel %vm783, %v762, %v714
        %v836 = vsel %vm783, %v763, %v715
        %v837 = vsel %vm783, %v764, %v716
        %v838 = vsel %vm783, %v765, %v717
        %v839 = vsel %vm783, %v766, %v718
        %v840 = vsel %vm783, %v767, %v719
        %v841 = vsel %vm783, %v768, %v720
        %v842 = vsel %vm783, %v769, %v721
        %v843 = vsel %vm783, %v770, %v722
        %v844 = vsel %vm783, %v771, %v723
        %v845 = vsel %vm783, %v772, %v724
        %v846 = vsel %vm783, %v773, %v725
        %v847 = vsel %vm783, %v774, %v726
        %v848 = vsel %vm783, %v775, %v727
        %v849 = vsel %vm783, %v776, %v728
        %v850 = vsel %vm783, %v777, %v729
        %v851 = vsel %vm783, %v778, %v730
        %v852 = vsel %vm783, %v779, %v731
        %v853 = vsel %vm783, %v780, %v732
        %v854 = vsel %vm783, %v781, %v733
        %v855 = vsel %vm783, %v782, %v734
        %v856 = vsel %vm491, 0.0, %v808
        %v857 = vsel %vm492, 0.0, %v784
        %v858 = vsel %vm493, 0.0, %v832
        %v859 = vsel %vm491, 0.0, %v809
        %v860 = vsel %vm492, 0.0, %v785
        %v861 = vsel %vm493, 0.0, %v833
        %v862 = vsel %vm491, 0.0, %v810
        %v863 = vsel %vm492, 0.0, %v786
        %v864 = vsel %vm493, 0.0, %v834
        %v865 = vsel %vm491, 0.0, %v811
        %v866 = vsel %vm492, 0.0, %v787
        %v867 = vsel %vm493, 0.0, %v835
        %v868 = vsel %vm491, 0.0, %v812
        %v869 = vsel %vm492, 0.0, %v788
        %v870 = vsel %vm493, 0.0, %v836
        %v871 = vsel %vm491, 0.0, %v813
        %v872 = vsel %vm492, 0.0, %v789
        %v873 = vsel %vm493, 0.0, %v837
        %v874 = vsel %vm491, 0.0, %v814
        %v875 = vsel %vm492, 0.0, %v790
        %v876 = vsel %vm493, 0.0, %v838
        %v877 = vsel %vm491, 0.0, %v815
        %v878 = vsel %vm492, 0.0, %v791
        %v879 = vsel %vm493, 0.0, %v839
        %v880 = vsel %vm491, 0.0, %v816
        %v881 = vsel %vm492, 0.0, %v792
        %v882 = vsel %vm493, 0.0, %v840
        %v883 = vsel %vm491, 0.0, %v817
        %v884 = vsel %vm492, 0.0, %v793
        %v885 = vsel %vm493, 0.0, %v841
        %v886 = vsel %vm491, 0.0, %v818
        %v887 = vsel %vm492, 0.0, %v794
        %v888 = vsel %vm493, 0.0, %v842
        %v889 = vsel %vm491, 0.0, %v819
        %v890 = vsel %vm492, 0.0, %v795
        %v891 = vsel %vm493, 0.0, %v843
        %v892 = vsel %vm491, 0.0, %v820
        %v893 = vsel %vm492, 0.0, %v796
        %v894 = vsel %vm493, 0.0, %v844
        %v895 = vsel %vm491, 0.0, %v821
        %v896 = vsel %vm492, 0.0, %v797
        %v897 = vsel %vm493, 0.0, %v845
        %v898 = vsel %vm491, 0.0, %v822
        %v899 = vsel %vm492, 0.0, %v798
        %v900 = vsel %vm493, 0.0, %v846
        %v901 = vsel %vm491, 0.0, %v823
        %v902 = vsel %vm492, 0.0, %v799
        %v903 = vsel %vm493, 0.0, %v847
        %v904 = vsel %vm491, 0.0, %v824
        %v905 = vsel %vm492, 0.0, %v800
        %v906 = vsel %vm493, 0.0, %v848
        %v907 = vsel %vm491, 0.0, %v825
        %v908 = vsel %vm492, 0.0, %v801
        %v909 = vsel %vm493, 0.0, %v849
        %v910 = vsel %vm491, 0.0, %v826
        %v911 = vsel %vm492, 0.0, %v802
        %v912 = vsel %vm493, 0.0, %v850
        %v913 = vsel %vm491, 0.0, %v827
        %v914 = vsel %vm492, 0.0, %v803
        %v915 = vsel %vm493, 0.0, %v851
        %v916 = vsel %vm491, 0.0, %v828
        %v917 = vsel %vm492, 0.0, %v804
        %v918 = vsel %vm493, 0.0, %v852
        %v919 = vsel %vm491, 0.0, %v829
        %v920 = vsel %vm492, 0.0, %v805
        %v921 = vsel %vm493, 0.0, %v853
        %v922 = vsel %vm491, 0.0, %v830
        %v923 = vsel %vm492, 0.0, %v806
        %v924 = vsel %vm493, 0.0, %v854
        %v925 = vsel %vm491, 0.0, %v831
        %v926 = vsel %vm492, 0.0, %v807
        %v927 = vsel %vm493, 0.0, %v855
        %v928 = vld [vmem:[#allocation8] sm:$0x1]
        %v929 = vlaneseq
        %v930 = vshrl.u32 %v929, 7
        %v931 = vsub.s32 0, %v930
        %v932 = vrot.slane %v928, %v931
        %v933 = vmul.f32 %v639, %v932
        %v934 = vmul.f32 %v640, %v932
        %v935 = vmul.f32 %v641, %v932
        %v936 = vmul.f32 %v642, %v932
        %v937 = vmul.f32 %v643, %v932
        %v938 = vmul.f32 %v644, %v932
        %v939 = vmul.f32 %v645, %v932
        %v940 = vmul.f32 %v646, %v932
        %v941 = vmul.f32 %v647, %v932
        %v942 = vmul.f32 %v648, %v932
        %v943 = vmul.f32 %v649, %v932
        %v944 = vmul.f32 %v650, %v932
        %v945 = vmul.f32 %v651, %v932
        %v946 = vmul.f32 %v652, %v932
        %v947 = vmul.f32 %v653, %v932
        %v948 = vmul.f32 %v654, %v932
        %v949 = vmul.f32 %v655, %v932
        %v950 = vmul.f32 %v656, %v932
        %v951 = vmul.f32 %v657, %v932
        %v952 = vmul.f32 %v658, %v932
        %v953 = vmul.f32 %v659, %v932
        %v954 = vmul.f32 %v660, %v932
        %v955 = vmul.f32 %v661, %v932
        %v956 = vmul.f32 %v662, %v932
        %v957 = vmul.f32 %v663, %v932
        %v958 = vmul.f32 %v664, %v932
        %v959 = vmul.f32 %v665, %v932
        %v960 = vmul.f32 %v666, %v932
        %v961 = vmul.f32 %v667, %v932
        %v962 = vmul.f32 %v668, %v932
        %v963 = vmul.f32 %v669, %v932
        %v964 = vmul.f32 %v670, %v932
        %v965 = vmul.f32 %v671, %v932
        %v966 = vmul.f32 %v672, %v932
        %v967 = vmul.f32 %v673, %v932
        %v968 = vmul.f32 %v674, %v932
        %v969 = vmul.f32 %v675, %v932
        %v970 = vmul.f32 %v676, %v932
        %v971 = vmul.f32 %v677, %v932
        %v972 = vmul.f32 %v678, %v932
        %v973 = vmul.f32 %v679, %v932
        %v974 = vmul.f32 %v680, %v932
        %v975 = vmul.f32 %v681, %v932
        %v976 = vmul.f32 %v682, %v932
        %v977 = vmul.f32 %v683, %v932
        %v978 = vmul.f32 %v684, %v932
        %v979 = vmul.f32 %v685, %v932
        %v980 = vmul.f32 %v686, %v932
        %v981 = vmul.f32 %v687, %v932
        %v982 = vmul.f32 %v688, %v932
        %v983 = vmul.f32 %v689, %v932
        %v984 = vmul.f32 %v690, %v932
        %v985 = vmul.f32 %v691, %v932
        %v986 = vmul.f32 %v692, %v932
        %v987 = vmul.f32 %v693, %v932
        %v988 = vmul.f32 %v694, %v932
        %v989 = vmul.f32 %v695, %v932
        %v990 = vmul.f32 %v696, %v932
        %v991 = vmul.f32 %v697, %v932
        %v992 = vmul.f32 %v698, %v932
        %v993 = vmul.f32 %v699, %v932
        %v994 = vmul.f32 %v700, %v932
        %v995 = vmul.f32 %v701, %v932
        %v996 = vmul.f32 %v702, %v932
        %v997 = vmul.f32 %v703, %v932
        %v998 = vmul.f32 %v704, %v932
        %v999 = vmul.f32 %v705, %v932
        %v1000 = vmul.f32 %v706, %v932
        %v1001 = vmul.f32 %v707, %v932
        %v1002 = vmul.f32 %v708, %v932
        %v1003 = vmul.f32 %v709, %v932
        %v1004 = vmul.f32 %v710, %v932
        %v1005 = vld [vmem:[#allocation8 + $0x1] sm:$0x1]
        %v1006 = vlaneseq
        %v1007 = vshrl.u32 %v1006, 7
        %v1008 = vsub.s32 0, %v1007
        %v1009 = vrot.slane %v1005, %v1008
        %v1010 = vmul.f32 %v478, %v1009
        %v1011 = vmul.f32 %v479, %v1009
        %v1012 = vmul.f32 %v480, %v1009
        %v1013 = vmul.f32 %v406, %v1009
        %v1014 = vmul.f32 %v407, %v1009
        %v1015 = vmul.f32 %v408, %v1009
        %v1016 = vmul.f32 %v409, %v1009
        %v1017 = vmul.f32 %v410, %v1009
        %v1018 = vmul.f32 %v411, %v1009
        %v1019 = vmul.f32 %v412, %v1009
        %v1020 = vmul.f32 %v413, %v1009
        %v1021 = vmul.f32 %v414, %v1009
        %v1022 = vmul.f32 %v415, %v1009
        %v1023 = vmul.f32 %v416, %v1009
        %v1024 = vmul.f32 %v417, %v1009
        %v1025 = vmul.f32 %v418, %v1009
        %v1026 = vmul.f32 %v419, %v1009
        %v1027 = vmul.f32 %v420, %v1009
        %v1028 = vmul.f32 %v421, %v1009
        %v1029 = vmul.f32 %v422, %v1009
        %v1030 = vmul.f32 %v423, %v1009
        %v1031 = vmul.f32 %v424, %v1009
        %v1032 = vmul.f32 %v425, %v1009
        %v1033 = vmul.f32 %v426, %v1009
        %v1034 = vmul.f32 %v427, %v1009
        %v1035 = vmul.f32 %v428, %v1009
        %v1036 = vmul.f32 %v429, %v1009
        %v1037 = vmul.f32 %v430, %v1009
        %v1038 = vmul.f32 %v431, %v1009
        %v1039 = vmul.f32 %v432, %v1009
        %v1040 = vmul.f32 %v433, %v1009
        %v1041 = vmul.f32 %v434, %v1009
        %v1042 = vmul.f32 %v435, %v1009
        %v1043 = vmul.f32 %v436, %v1009
        %v1044 = vmul.f32 %v437, %v1009
        %v1045 = vmul.f32 %v438, %v1009
        %v1046 = vmul.f32 %v439, %v1009
        %v1047 = vmul.f32 %v440, %v1009
        %v1048 = vmul.f32 %v441, %v1009
        %v1049 = vmul.f32 %v442, %v1009
        %v1050 = vmul.f32 %v443, %v1009
        %v1051 = vmul.f32 %v444, %v1009
        %v1052 = vmul.f32 %v445, %v1009
        %v1053 = vmul.f32 %v446, %v1009
        %v1054 = vmul.f32 %v447, %v1009
        %v1055 = vmul.f32 %v448, %v1009
        %v1056 = vmul.f32 %v449, %v1009
        %v1057 = vmul.f32 %v450, %v1009
        %v1058 = vmul.f32 %v451, %v1009
        %v1059 = vmul.f32 %v452, %v1009
        %v1060 = vmul.f32 %v453, %v1009
        %v1061 = vmul.f32 %v454, %v1009
        %v1062 = vmul.f32 %v455, %v1009
        %v1063 = vmul.f32 %v456, %v1009
        %v1064 = vmul.f32 %v457, %v1009
        %v1065 = vmul.f32 %v458, %v1009
        %v1066 = vmul.f32 %v459, %v1009
        %v1067 = vmul.f32 %v460, %v1009
        %v1068 = vmul.f32 %v461, %v1009
        %v1069 = vmul.f32 %v462, %v1009
        %v1070 = vmul.f32 %v463, %v1009
        %v1071 = vmul.f32 %v464, %v1009
        %v1072 = vmul.f32 %v465, %v1009
        %v1073 = vmul.f32 %v466, %v1009
        %v1074 = vmul.f32 %v467, %v1009
        %v1075 = vmul.f32 %v468, %v1009
        %v1076 = vmul.f32 %v469, %v1009
        %v1077 = vmul.f32 %v470, %v1009
        %v1078 = vmul.f32 %v471, %v1009
        %v1079 = vmul.f32 %v472, %v1009
        %v1080 = vmul.f32 %v473, %v1009
        %v1081 = vmul.f32 %v474, %v1009
        %v1082 = vadd.f32 %v933, %v1010
        %v1083 = vadd.f32 %v934, %v1011
        %v1084 = vadd.f32 %v935, %v1012
        %v1085 = vadd.f32 %v936, %v1013
        %v1086 = vadd.f32 %v937, %v1014
        %v1087 = vadd.f32 %v938, %v1015
        %v1088 = vadd.f32 %v939, %v1016
        %v1089 = vadd.f32 %v940, %v1017
        %v1090 = vadd.f32 %v941, %v1018
        %v1091 = vadd.f32 %v942, %v1019
        %v1092 = vadd.f32 %v943, %v1020
        %v1093 = vadd.f32 %v944, %v1021
        %v1094 = vadd.f32 %v945, %v1022
        %v1095 = vadd.f32 %v946, %v1023
        %v1096 = vadd.f32 %v947, %v1024
        %v1097 = vadd.f32 %v948, %v1025
        %v1098 = vadd.f32 %v949, %v1026
        %v1099 = vadd.f32 %v950, %v1027
        %v1100 = vadd.f32 %v951, %v1028
        %v1101 = vadd.f32 %v952, %v1029
        %v1102 = vadd.f32 %v953, %v1030
        %v1103 = vadd.f32 %v954, %v1031
        %v1104 = vadd.f32 %v955, %v1032
        %v1105 = vadd.f32 %v956, %v1033
        %v1106 = vadd.f32 %v957, %v1034
        %v1107 = vadd.f32 %v958, %v1035
        %v1108 = vadd.f32 %v959, %v1036
        %v1109 = vadd.f32 %v960, %v1037
        %v1110 = vadd.f32 %v961, %v1038
        %v1111 = vadd.f32 %v962, %v1039
        %v1112 = vadd.f32 %v963, %v1040
        %v1113 = vadd.f32 %v964, %v1041
        %v1114 = vadd.f32 %v965, %v1042
        %v1115 = vadd.f32 %v966, %v1043
        %v1116 = vadd.f32 %v967, %v1044
        %v1117 = vadd.f32 %v968, %v1045
        %v1118 = vadd.f32 %v969, %v1046
        %v1119 = vadd.f32 %v970, %v1047
        %v1120 = vadd.f32 %v971, %v1048
        %v1121 = vadd.f32 %v972, %v1049
        %v1122 = vadd.f32 %v973, %v1050
        %v1123 = vadd.f32 %v974, %v1051
        %v1124 = vadd.f32 %v975, %v1052
        %v1125 = vadd.f32 %v976, %v1053
        %v1126 = vadd.f32 %v977, %v1054
        %v1127 = vadd.f32 %v978, %v1055
        %v1128 = vadd.f32 %v979, %v1056
        %v1129 = vadd.f32 %v980, %v1057
        %v1130 = vadd.f32 %v981, %v1058
        %v1131 = vadd.f32 %v982, %v1059
        %v1132 = vadd.f32 %v983, %v1060
        %v1133 = vadd.f32 %v984, %v1061
        %v1134 = vadd.f32 %v985, %v1062
        %v1135 = vadd.f32 %v986, %v1063
        %v1136 = vadd.f32 %v987, %v1064
        %v1137 = vadd.f32 %v988, %v1065
        %v1138 = vadd.f32 %v989, %v1066
        %v1139 = vadd.f32 %v990, %v1067
        %v1140 = vadd.f32 %v991, %v1068
        %v1141 = vadd.f32 %v992, %v1069
        %v1142 = vadd.f32 %v993, %v1070
        %v1143 = vadd.f32 %v994, %v1071
        %v1144 = vadd.f32 %v995, %v1072
        %v1145 = vadd.f32 %v996, %v1073
        %v1146 = vadd.f32 %v997, %v1074
        %v1147 = vadd.f32 %v998, %v1075
        %v1148 = vadd.f32 %v999, %v1076
        %v1149 = vadd.f32 %v1000, %v1077
        %v1150 = vadd.f32 %v1001, %v1078
        %v1151 = vadd.f32 %v1002, %v1079
        %v1152 = vadd.f32 %v1003, %v1080
        %v1153 = vadd.f32 %v1004, %v1081
        %v1154 = vld [vmem:[#allocation8 + $0x2] sm:$0x1]
        %v1155 = vlaneseq
        %v1156 = vshrl.u32 %v1155, 7
        %v1157 = vsub.s32 0, %v1156
        %v1158 = vrot.slane %v1154, %v1157
        %v1159 = vmul.f32 %v856, %v1158
        %v1160 = vmul.f32 %v857, %v1158
        %v1161 = vmul.f32 %v858, %v1158
        %v1162 = vmul.f32 %v859, %v1158
        %v1163 = vmul.f32 %v860, %v1158
        %v1164 = vmul.f32 %v861, %v1158
        %v1165 = vmul.f32 %v862, %v1158
        %v1166 = vmul.f32 %v863, %v1158
        %v1167 = vmul.f32 %v864, %v1158
        %v1168 = vmul.f32 %v865, %v1158
        %v1169 = vmul.f32 %v866, %v1158
        %v1170 = vmul.f32 %v867, %v1158
        %v1171 = vmul.f32 %v868, %v1158
        %v1172 = vmul.f32 %v869, %v1158
        %v1173 = vmul.f32 %v870, %v1158
        %v1174 = vmul.f32 %v871, %v1158
        %v1175 = vmul.f32 %v872, %v1158
        %v1176 = vmul.f32 %v873, %v1158
        %v1177 = vmul.f32 %v874, %v1158
        %v1178 = vmul.f32 %v875, %v1158
        %v1179 = vmul.f32 %v876, %v1158
        %v1180 = vmul.f32 %v877, %v1158
        %v1181 = vmul.f32 %v878, %v1158
        %v1182 = vmul.f32 %v879, %v1158
        %v1183 = vmul.f32 %v880, %v1158
        %v1184 = vmul.f32 %v881, %v1158
        %v1185 = vmul.f32 %v882, %v1158
        %v1186 = vmul.f32 %v883, %v1158
        %v1187 = vmul.f32 %v884, %v1158
        %v1188 = vmul.f32 %v885, %v1158
        %v1189 = vmul.f32 %v886, %v1158
        %v1190 = vmul.f32 %v887, %v1158
        %v1191 = vmul.f32 %v888, %v1158
        %v1192 = vmul.f32 %v889, %v1158
        %v1193 = vmul.f32 %v890, %v1158
        %v1194 = vmul.f32 %v891, %v1158
        %v1195 = vmul.f32 %v892, %v1158
        %v1196 = vmul.f32 %v893, %v1158
        %v1197 = vmul.f32 %v894, %v1158
        %v1198 = vmul.f32 %v895, %v1158
        %v1199 = vmul.f32 %v896, %v1158
        %v1200 = vmul.f32 %v897, %v1158
        %v1201 = vmul.f32 %v898, %v1158
        %v1202 = vmul.f32 %v899, %v1158
        %v1203 = vmul.f32 %v900, %v1158
        %v1204 = vmul.f32 %v901, %v1158
        %v1205 = vmul.f32 %v902, %v1158
        %v1206 = vmul.f32 %v903, %v1158
        %v1207 = vmul.f32 %v904, %v1158
        %v1208 = vmul.f32 %v905, %v1158
        %v1209 = vmul.f32 %v906, %v1158
        %v1210 = vmul.f32 %v907, %v1158
        %v1211 = vmul.f32 %v908, %v1158
        %v1212 = vmul.f32 %v909, %v1158
        %v1213 = vmul.f32 %v910, %v1158
        %v1214 = vmul.f32 %v911, %v1158
        %v1215 = vmul.f32 %v912, %v1158
        %v1216 = vmul.f32 %v913, %v1158
        %v1217 = vmul.f32 %v914, %v1158
        %v1218 = vmul.f32 %v915, %v1158
        %v1219 = vmul.f32 %v916, %v1158
        %v1220 = vmul.f32 %v917, %v1158
        %v1221 = vmul.f32 %v918, %v1158
        %v1222 = vmul.f32 %v919, %v1158
        %v1223 = vmul.f32 %v920, %v1158
        %v1224 = vmul.f32 %v921, %v1158
        %v1225 = vmul.f32 %v922, %v1158
        %v1226 = vmul.f32 %v923, %v1158
        %v1227 = vmul.f32 %v924, %v1158
        %v1228 = vmul.f32 %v925, %v1158
        %v1229 = vmul.f32 %v926, %v1158
        %v1230 = vmul.f32 %v927, %v1158
        %v1231 = vadd.f32 %v1082, %v1159
        %v1232 = vadd.f32 %v1083, %v1160
        %v1233 = vadd.f32 %v1084, %v1161
        %v1234 = vadd.f32 %v1085, %v1162
        %v1235 = vadd.f32 %v1086, %v1163
        %v1236 = vadd.f32 %v1087, %v1164
        %v1237 = vadd.f32 %v1088, %v1165
        %v1238 = vadd.f32 %v1089, %v1166
        %v1239 = vadd.f32 %v1090, %v1167
        %v1240 = vadd.f32 %v1091, %v1168
        %v1241 = vadd.f32 %v1092, %v1169
        %v1242 = vadd.f32 %v1093, %v1170
        %v1243 = vadd.f32 %v1094, %v1171
        %v1244 = vadd.f32 %v1095, %v1172
        %v1245 = vadd.f32 %v1096, %v1173
        %v1246 = vadd.f32 %v1097, %v1174
        %v1247 = vadd.f32 %v1098, %v1175
        %v1248 = vadd.f32 %v1099, %v1176
        %v1249 = vadd.f32 %v1100, %v1177
        %v1250 = vadd.f32 %v1101, %v1178
        %v1251 = vadd.f32 %v1102, %v1179
        %v1252 = vadd.f32 %v1103, %v1180
        %v1253 = vadd.f32 %v1104, %v1181
        %v1254 = vadd.f32 %v1105, %v1182
        %v1255 = vadd.f32 %v1106, %v1183
        %v1256 = vadd.f32 %v1107, %v1184
        %v1257 = vadd.f32 %v1108, %v1185
        %v1258 = vadd.f32 %v1109, %v1186
        %v1259 = vadd.f32 %v1110, %v1187
        %v1260 = vadd.f32 %v1111, %v1188
        %v1261 = vadd.f32 %v1112, %v1189
        %v1262 = vadd.f32 %v1113, %v1190
        %v1263 = vadd.f32 %v1114, %v1191
        %v1264 = vadd.f32 %v1115, %v1192
        %v1265 = vadd.f32 %v1116, %v1193
        %v1266 = vadd.f32 %v1117, %v1194
        %v1267 = vadd.f32 %v1118, %v1195
        %v1268 = vadd.f32 %v1119, %v1196
        %v1269 = vadd.f32 %v1120, %v1197
        %v1270 = vadd.f32 %v1121, %v1198
        %v1271 = vadd.f32 %v1122, %v1199
        %v1272 = vadd.f32 %v1123, %v1200
        %v1273 = vadd.f32 %v1124, %v1201
        %v1274 = vadd.f32 %v1125, %v1202
        %v1275 = vadd.f32 %v1126, %v1203
        %v1276 = vadd.f32 %v1127, %v1204
        %v1277 = vadd.f32 %v1128, %v1205
        %v1278 = vadd.f32 %v1129, %v1206
        %v1279 = vadd.f32 %v1130, %v1207
        %v1280 = vadd.f32 %v1131, %v1208
        %v1281 = vadd.f32 %v1132, %v1209
        %v1282 = vadd.f32 %v1133, %v1210
        %v1283 = vadd.f32 %v1134, %v1211
        %v1284 = vadd.f32 %v1135, %v1212
        %v1285 = vadd.f32 %v1136, %v1213
        %v1286 = vadd.f32 %v1137, %v1214
        %v1287 = vadd.f32 %v1138, %v1215
        %v1288 = vadd.f32 %v1139, %v1216
        %v1289 = vadd.f32 %v1140, %v1217
        %v1290 = vadd.f32 %v1141, %v1218
        %v1291 = vadd.f32 %v1142, %v1219
        %v1292 = vadd.f32 %v1143, %v1220
        %v1293 = vadd.f32 %v1144, %v1221
        %v1294 = vadd.f32 %v1145, %v1222
        %v1295 = vadd.f32 %v1146, %v1223
        %v1296 = vadd.f32 %v1147, %v1224
        %v1297 = vadd.f32 %v1148, %v1225
        %v1298 = vadd.f32 %v1149, %v1226
        %v1299 = vadd.f32 %v1150, %v1227
        %v1300 = vadd.f32 %v1151, %v1228
        %v1301 = vadd.f32 %v1152, %v1229
        %v1302 = vadd.f32 %v1153, %v1230
        %v1303 = vrot.slane %v475, 7
        %v1304 = vrot.slane %v476, 7
        %v1305 = vrot.slane %v477, 7
        %v1306 = vsel %vm566, %v1304, %v1305
        %v1307 = vsel %vm566, %v1303, %v1304
        %v1308 = vsel %vm566, %v1305, %v1303
        %v1309 = vsel %vm488, 0.0, %v1308
        %v1310 = vsel %vm489, 0.0, %v1307
        %v1311 = vsel %vm490, 0.0, %v1306
        %v1312 = vrot.slane %v475, 1
        %v1313 = vrot.slane %v476, 1
        %v1314 = vrot.slane %v477, 1
        %v1315 = vsel %vm783, %v1313, %v1314
        %v1316 = vsel %vm783, %v1312, %v1313
        %v1317 = vsel %vm783, %v1314, %v1312
        %v1318 = vsel %vm491, 0.0, %v1316
        %v1319 = vsel %vm492, 0.0, %v1315
        %v1320 = vsel %vm493, 0.0, %v1317
        %s1321 = scalar_lea.vmem [#allocation8], 4
        %v1322 = vld [vmem:[%s1321] sm:$0x1]
        %v1323 = vlaneseq
        %v1324 = vshrl.u32 %v1323, 7
        %v1325 = vsub.s32 0, %v1324
        %v1326 = vrot.slane %v1322, %v1325
        %v1327 = vmul.f32 %v642, %v1326
        %v1328 = vmul.f32 %v643, %v1326
        %v1329 = vmul.f32 %v644, %v1326
        %v1330 = vmul.f32 %v645, %v1326
        %v1331 = vmul.f32 %v646, %v1326
        %v1332 = vmul.f32 %v647, %v1326
        %v1333 = vmul.f32 %v648, %v1326
        %v1334 = vmul.f32 %v649, %v1326
        %v1335 = vmul.f32 %v650, %v1326
        %v1336 = vmul.f32 %v651, %v1326
        %v1337 = vmul.f32 %v652, %v1326
        %v1338 = vmul.f32 %v653, %v1326
        %v1339 = vmul.f32 %v654, %v1326
        %v1340 = vmul.f32 %v655, %v1326
        %v1341 = vmul.f32 %v656, %v1326
        %v1342 = vmul.f32 %v657, %v1326
        %v1343 = vmul.f32 %v658, %v1326
        %v1344 = vmul.f32 %v659, %v1326
        %v1345 = vmul.f32 %v660, %v1326
        %v1346 = vmul.f32 %v661, %v1326
        %v1347 = vmul.f32 %v662, %v1326
        %v1348 = vmul.f32 %v663, %v1326
        %v1349 = vmul.f32 %v664, %v1326
        %v1350 = vmul.f32 %v665, %v1326
        %v1351 = vmul.f32 %v666, %v1326
        %v1352 = vmul.f32 %v667, %v1326
        %v1353 = vmul.f32 %v668, %v1326
        %v1354 = vmul.f32 %v669, %v1326
        %v1355 = vmul.f32 %v670, %v1326
        %v1356 = vmul.f32 %v671, %v1326
        %v1357 = vmul.f32 %v672, %v1326
        %v1358 = vmul.f32 %v673, %v1326
        %v1359 = vmul.f32 %v674, %v1326
        %v1360 = vmul.f32 %v675, %v1326
        %v1361 = vmul.f32 %v676, %v1326
        %v1362 = vmul.f32 %v677, %v1326
        %v1363 = vmul.f32 %v678, %v1326
        %v1364 = vmul.f32 %v679, %v1326
        %v1365 = vmul.f32 %v680, %v1326
        %v1366 = vmul.f32 %v681, %v1326
        %v1367 = vmul.f32 %v682, %v1326
        %v1368 = vmul.f32 %v683, %v1326
        %v1369 = vmul.f32 %v684, %v1326
        %v1370 = vmul.f32 %v685, %v1326
        %v1371 = vmul.f32 %v686, %v1326
        %v1372 = vmul.f32 %v687, %v1326
        %v1373 = vmul.f32 %v688, %v1326
        %v1374 = vmul.f32 %v689, %v1326
        %v1375 = vmul.f32 %v690, %v1326
        %v1376 = vmul.f32 %v691, %v1326
        %v1377 = vmul.f32 %v692, %v1326
        %v1378 = vmul.f32 %v693, %v1326
        %v1379 = vmul.f32 %v694, %v1326
        %v1380 = vmul.f32 %v695, %v1326
        %v1381 = vmul.f32 %v696, %v1326
        %v1382 = vmul.f32 %v697, %v1326
        %v1383 = vmul.f32 %v698, %v1326
        %v1384 = vmul.f32 %v699, %v1326
        %v1385 = vmul.f32 %v700, %v1326
        %v1386 = vmul.f32 %v701, %v1326
        %v1387 = vmul.f32 %v702, %v1326
        %v1388 = vmul.f32 %v703, %v1326
        %v1389 = vmul.f32 %v704, %v1326
        %v1390 = vmul.f32 %v705, %v1326
        %v1391 = vmul.f32 %v706, %v1326
        %v1392 = vmul.f32 %v707, %v1326
        %v1393 = vmul.f32 %v708, %v1326
        %v1394 = vmul.f32 %v709, %v1326
        %v1395 = vmul.f32 %v710, %v1326
        %v1396 = vmul.f32 %v1309, %v1326
        %v1397 = vmul.f32 %v1310, %v1326
        %v1398 = vmul.f32 %v1311, %v1326
        %v1399 = vld [vmem:[%s1321 + $0x1] sm:$0x1]
        %v1400 = vlaneseq
        %v1401 = vshrl.u32 %v1400, 7
        %v1402 = vsub.s32 0, %v1401
        %v1403 = vrot.slane %v1399, %v1402
        %v1404 = vmul.f32 %v406, %v1403
        %v1405 = vmul.f32 %v407, %v1403
        %v1406 = vmul.f32 %v408, %v1403
        %v1407 = vmul.f32 %v409, %v1403
        %v1408 = vmul.f32 %v410, %v1403
        %v1409 = vmul.f32 %v411, %v1403
        %v1410 = vmul.f32 %v412, %v1403
        %v1411 = vmul.f32 %v413, %v1403
        %v1412 = vmul.f32 %v414, %v1403
        %v1413 = vmul.f32 %v415, %v1403
        %v1414 = vmul.f32 %v416, %v1403
        %v1415 = vmul.f32 %v417, %v1403
        %v1416 = vmul.f32 %v418, %v1403
        %v1417 = vmul.f32 %v419, %v1403
        %v1418 = vmul.f32 %v420, %v1403
        %v1419 = vmul.f32 %v421, %v1403
        %v1420 = vmul.f32 %v422, %v1403
        %v1421 = vmul.f32 %v423, %v1403
        %v1422 = vmul.f32 %v424, %v1403
        %v1423 = vmul.f32 %v425, %v1403
        %v1424 = vmul.f32 %v426, %v1403
        %v1425 = vmul.f32 %v427, %v1403
        %v1426 = vmul.f32 %v428, %v1403
        %v1427 = vmul.f32 %v429, %v1403
        %v1428 = vmul.f32 %v430, %v1403
        %v1429 = vmul.f32 %v431, %v1403
        %v1430 = vmul.f32 %v432, %v1403
        %v1431 = vmul.f32 %v433, %v1403
        %v1432 = vmul.f32 %v434, %v1403
        %v1433 = vmul.f32 %v435, %v1403
        %v1434 = vmul.f32 %v436, %v1403
        %v1435 = vmul.f32 %v437, %v1403
        %v1436 = vmul.f32 %v438, %v1403
        %v1437 = vmul.f32 %v439, %v1403
        %v1438 = vmul.f32 %v440, %v1403
        %v1439 = vmul.f32 %v441, %v1403
        %v1440 = vmul.f32 %v442, %v1403
        %v1441 = vmul.f32 %v443, %v1403
        %v1442 = vmul.f32 %v444, %v1403
        %v1443 = vmul.f32 %v445, %v1403
        %v1444 = vmul.f32 %v446, %v1403
        %v1445 = vmul.f32 %v447, %v1403
        %v1446 = vmul.f32 %v448, %v1403
        %v1447 = vmul.f32 %v449, %v1403
        %v1448 = vmul.f32 %v450, %v1403
        %v1449 = vmul.f32 %v451, %v1403
        %v1450 = vmul.f32 %v452, %v1403
        %v1451 = vmul.f32 %v453, %v1403
        %v1452 = vmul.f32 %v454, %v1403
        %v1453 = vmul.f32 %v455, %v1403
        %v1454 = vmul.f32 %v456, %v1403
        %v1455 = vmul.f32 %v457, %v1403
        %v1456 = vmul.f32 %v458, %v1403
        %v1457 = vmul.f32 %v459, %v1403
        %v1458 = vmul.f32 %v460, %v1403
        %v1459 = vmul.f32 %v461, %v1403
        %v1460 = vmul.f32 %v462, %v1403
        %v1461 = vmul.f32 %v463, %v1403
        %v1462 = vmul.f32 %v464, %v1403
        %v1463 = vmul.f32 %v465, %v1403
        %v1464 = vmul.f32 %v466, %v1403
        %v1465 = vmul.f32 %v467, %v1403
        %v1466 = vmul.f32 %v468, %v1403
        %v1467 = vmul.f32 %v469, %v1403
        %v1468 = vmul.f32 %v470, %v1403
        %v1469 = vmul.f32 %v471, %v1403
        %v1470 = vmul.f32 %v472, %v1403
        %v1471 = vmul.f32 %v473, %v1403
        %v1472 = vmul.f32 %v474, %v1403
        %v1473 = vmul.f32 %v475, %v1403
        %v1474 = vmul.f32 %v476, %v1403
        %v1475 = vmul.f32 %v477, %v1403
        %v1476 = vadd.f32 %v1327, %v1404
        %v1477 = vadd.f32 %v1328, %v1405
        %v1478 = vadd.f32 %v1329, %v1406
        %v1479 = vadd.f32 %v1330, %v1407
        %v1480 = vadd.f32 %v1331, %v1408
        %v1481 = vadd.f32 %v1332, %v1409
        %v1482 = vadd.f32 %v1333, %v1410
        %v1483 = vadd.f32 %v1334, %v1411
        %v1484 = vadd.f32 %v1335, %v1412
        %v1485 = vadd.f32 %v1336, %v1413
        %v1486 = vadd.f32 %v1337, %v1414
        %v1487 = vadd.f32 %v1338, %v1415
        %v1488 = vadd.f32 %v1339, %v1416
        %v1489 = vadd.f32 %v1340, %v1417
        %v1490 = vadd.f32 %v1341, %v1418
        %v1491 = vadd.f32 %v1342, %v1419
        %v1492 = vadd.f32 %v1343, %v1420
        %v1493 = vadd.f32 %v1344, %v1421
        %v1494 = vadd.f32 %v1345, %v1422
        %v1495 = vadd.f32 %v1346, %v1423
        %v1496 = vadd.f32 %v1347, %v1424
        %v1497 = vadd.f32 %v1348, %v1425
        %v1498 = vadd.f32 %v1349, %v1426
        %v1499 = vadd.f32 %v1350, %v1427
        %v1500 = vadd.f32 %v1351, %v1428
        %v1501 = vadd.f32 %v1352, %v1429
        %v1502 = vadd.f32 %v1353, %v1430
        %v1503 = vadd.f32 %v1354, %v1431
        %v1504 = vadd.f32 %v1355, %v1432
        %v1505 = vadd.f32 %v1356, %v1433
        %v1506 = vadd.f32 %v1357, %v1434
        %v1507 = vadd.f32 %v1358, %v1435
        %v1508 = vadd.f32 %v1359, %v1436
        %v1509 = vadd.f32 %v1360, %v1437
        %v1510 = vadd.f32 %v1361, %v1438
        %v1511 = vadd.f32 %v1362, %v1439
        %v1512 = vadd.f32 %v1363, %v1440
        %v1513 = vadd.f32 %v1364, %v1441
        %v1514 = vadd.f32 %v1365, %v1442
        %v1515 = vadd.f32 %v1366, %v1443
        %v1516 = vadd.f32 %v1367, %v1444
        %v1517 = vadd.f32 %v1368, %v1445
        %v1518 = vadd.f32 %v1369, %v1446
        %v1519 = vadd.f32 %v1370, %v1447
        %v1520 = vadd.f32 %v1371, %v1448
        %v1521 = vadd.f32 %v1372, %v1449
        %v1522 = vadd.f32 %v1373, %v1450
        %v1523 = vadd.f32 %v1374, %v1451
        %v1524 = vadd.f32 %v1375, %v1452
        %v1525 = vadd.f32 %v1376, %v1453
        %v1526 = vadd.f32 %v1377, %v1454
        %v1527 = vadd.f32 %v1378, %v1455
        %v1528 = vadd.f32 %v1379, %v1456
        %v1529 = vadd.f32 %v1380, %v1457
        %v1530 = vadd.f32 %v1381, %v1458
        %v1531 = vadd.f32 %v1382, %v1459
        %v1532 = vadd.f32 %v1383, %v1460
        %v1533 = vadd.f32 %v1384, %v1461
        %v1534 = vadd.f32 %v1385, %v1462
        %v1535 = vadd.f32 %v1386, %v1463
        %v1536 = vadd.f32 %v1387, %v1464
        %v1537 = vadd.f32 %v1388, %v1465
        %v1538 = vadd.f32 %v1389, %v1466
        %v1539 = vadd.f32 %v1390, %v1467
        %v1540 = vadd.f32 %v1391, %v1468
        %v1541 = vadd.f32 %v1392, %v1469
        %v1542 = vadd.f32 %v1393, %v1470
        %v1543 = vadd.f32 %v1394, %v1471
        %v1544 = vadd.f32 %v1395, %v1472
        %v1545 = vadd.f32 %v1396, %v1473
        %v1546 = vadd.f32 %v1397, %v1474
        %v1547 = vadd.f32 %v1398, %v1475
        %v1548 = vld [vmem:[%s1321 + $0x2] sm:$0x1]
        %v1549 = vlaneseq
        %v1550 = vshrl.u32 %v1549, 7
        %v1551 = vsub.s32 0, %v1550
        %v1552 = vrot.slane %v1548, %v1551
        %v1553 = vmul.f32 %v859, %v1552
        %v1554 = vmul.f32 %v860, %v1552
        %v1555 = vmul.f32 %v861, %v1552
        %v1556 = vmul.f32 %v862, %v1552
        %v1557 = vmul.f32 %v863, %v1552
        %v1558 = vmul.f32 %v864, %v1552
        %v1559 = vmul.f32 %v865, %v1552
        %v1560 = vmul.f32 %v866, %v1552
        %v1561 = vmul.f32 %v867, %v1552
        %v1562 = vmul.f32 %v868, %v1552
        %v1563 = vmul.f32 %v869, %v1552
        %v1564 = vmul.f32 %v870, %v1552
        %v1565 = vmul.f32 %v871, %v1552
        %v1566 = vmul.f32 %v872, %v1552
        %v1567 = vmul.f32 %v873, %v1552
        %v1568 = vmul.f32 %v874, %v1552
        %v1569 = vmul.f32 %v875, %v1552
        %v1570 = vmul.f32 %v876, %v1552
        %v1571 = vmul.f32 %v877, %v1552
        %v1572 = vmul.f32 %v878, %v1552
        %v1573 = vmul.f32 %v879, %v1552
        %v1574 = vmul.f32 %v880, %v1552
        %v1575 = vmul.f32 %v881, %v1552
        %v1576 = vmul.f32 %v882, %v1552
        %v1577 = vmul.f32 %v883, %v1552
        %v1578 = vmul.f32 %v884, %v1552
        %v1579 = vmul.f32 %v885, %v1552
        %v1580 = vmul.f32 %v886, %v1552
        %v1581 = vmul.f32 %v887, %v1552
        %v1582 = vmul.f32 %v888, %v1552
        %v1583 = vmul.f32 %v889, %v1552
        %v1584 = vmul.f32 %v890, %v1552
        %v1585 = vmul.f32 %v891, %v1552
        %v1586 = vmul.f32 %v892, %v1552
        %v1587 = vmul.f32 %v893, %v1552
        %v1588 = vmul.f32 %v894, %v1552
        %v1589 = vmul.f32 %v895, %v1552
        %v1590 = vmul.f32 %v896, %v1552
        %v1591 = vmul.f32 %v897, %v1552
        %v1592 = vmul.f32 %v898, %v1552
        %v1593 = vmul.f32 %v899, %v1552
        %v1594 = vmul.f32 %v900, %v1552
        %v1595 = vmul.f32 %v901, %v1552
        %v1596 = vmul.f32 %v902, %v1552
        %v1597 = vmul.f32 %v903, %v1552
        %v1598 = vmul.f32 %v904, %v1552
        %v1599 = vmul.f32 %v905, %v1552
        %v1600 = vmul.f32 %v906, %v1552
        %v1601 = vmul.f32 %v907, %v1552
        %v1602 = vmul.f32 %v908, %v1552
        %v1603 = vmul.f32 %v909, %v1552
        %v1604 = vmul.f32 %v910, %v1552
        %v1605 = vmul.f32 %v911, %v1552
        %v1606 = vmul.f32 %v912, %v1552
        %v1607 = vmul.f32 %v913, %v1552
        %v1608 = vmul.f32 %v914, %v1552
        %v1609 = vmul.f32 %v915, %v1552
        %v1610 = vmul.f32 %v916, %v1552
        %v1611 = vmul.f32 %v917, %v1552
        %v1612 = vmul.f32 %v918, %v1552
        %v1613 = vmul.f32 %v919, %v1552
        %v1614 = vmul.f32 %v920, %v1552
        %v1615 = vmul.f32 %v921, %v1552
        %v1616 = vmul.f32 %v922, %v1552
        %v1617 = vmul.f32 %v923, %v1552
        %v1618 = vmul.f32 %v924, %v1552
        %v1619 = vmul.f32 %v925, %v1552
        %v1620 = vmul.f32 %v926, %v1552
        %v1621 = vmul.f32 %v927, %v1552
        %v1622 = vmul.f32 %v1318, %v1552
        %v1623 = vmul.f32 %v1319, %v1552
        %v1624 = vmul.f32 %v1320, %v1552
        %v1625 = vadd.f32 %v1476, %v1553
        %v1626 = vadd.f32 %v1477, %v1554
        %v1627 = vadd.f32 %v1478, %v1555
        %v1628 = vadd.f32 %v1479, %v1556
        %v1629 = vadd.f32 %v1480, %v1557
        %v1630 = vadd.f32 %v1481, %v1558
        %v1631 = vadd.f32 %v1482, %v1559
        %v1632 = vadd.f32 %v1483, %v1560
        %v1633 = vadd.f32 %v1484, %v1561
        %v1634 = vadd.f32 %v1485, %v1562
        %v1635 = vadd.f32 %v1486, %v1563
        %v1636 = vadd.f32 %v1487, %v1564
        %v1637 = vadd.f32 %v1488, %v1565
        %v1638 = vadd.f32 %v1489, %v1566
        %v1639 = vadd.f32 %v1490, %v1567
        %v1640 = vadd.f32 %v1491, %v1568
        %v1641 = vadd.f32 %v1492, %v1569
        %v1642 = vadd.f32 %v1493, %v1570
        %v1643 = vadd.f32 %v1494, %v1571
        %v1644 = vadd.f32 %v1495, %v1572
        %v1645 = vadd.f32 %v1496, %v1573
        %v1646 = vadd.f32 %v1497, %v1574
        %v1647 = vadd.f32 %v1498, %v1575
        %v1648 = vadd.f32 %v1499, %v1576
        %v1649 = vadd.f32 %v1500, %v1577
        %v1650 = vadd.f32 %v1501, %v1578
        %v1651 = vadd.f32 %v1502, %v1579
        %v1652 = vadd.f32 %v1503, %v1580
        %v1653 = vadd.f32 %v1504, %v1581
        %v1654 = vadd.f32 %v1505, %v1582
        %v1655 = vadd.f32 %v1506, %v1583
        %v1656 = vadd.f32 %v1507, %v1584
        %v1657 = vadd.f32 %v1508, %v1585
        %v1658 = vadd.f32 %v1509, %v1586
        %v1659 = vadd.f32 %v1510, %v1587
        %v1660 = vadd.f32 %v1511, %v1588
        %v1661 = vadd.f32 %v1512, %v1589
        %v1662 = vadd.f32 %v1513, %v1590
        %v1663 = vadd.f32 %v1514, %v1591
        %v1664 = vadd.f32 %v1515, %v1592
        %v1665 = vadd.f32 %v1516, %v1593
        %v1666 = vadd.f32 %v1517, %v1594
        %v1667 = vadd.f32 %v1518, %v1595
        %v1668 = vadd.f32 %v1519, %v1596
        %v1669 = vadd.f32 %v1520, %v1597
        %v1670 = vadd.f32 %v1521, %v1598
        %v1671 = vadd.f32 %v1522, %v1599
        %v1672 = vadd.f32 %v1523, %v1600
        %v1673 = vadd.f32 %v1524, %v1601
        %v1674 = vadd.f32 %v1525, %v1602
        %v1675 = vadd.f32 %v1526, %v1603
        %v1676 = vadd.f32 %v1527, %v1604
        %v1677 = vadd.f32 %v1528, %v1605
        %v1678 = vadd.f32 %v1529, %v1606
        %v1679 = vadd.f32 %v1530, %v1607
        %v1680 = vadd.f32 %v1531, %v1608
        %v1681 = vadd.f32 %v1532, %v1609
        %v1682 = vadd.f32 %v1533, %v1610
        %v1683 = vadd.f32 %v1534, %v1611
        %v1684 = vadd.f32 %v1535, %v1612
        %v1685 = vadd.f32 %v1536, %v1613
        %v1686 = vadd.f32 %v1537, %v1614
        %v1687 = vadd.f32 %v1538, %v1615
        %v1688 = vadd.f32 %v1539, %v1616
        %v1689 = vadd.f32 %v1540, %v1617
        %v1690 = vadd.f32 %v1541, %v1618
        %v1691 = vadd.f32 %v1542, %v1619
        %v1692 = vadd.f32 %v1543, %v1620
        %v1693 = vadd.f32 %v1544, %v1621
        %v1694 = vadd.f32 %v1545, %v1622
        %v1695 = vadd.f32 %v1546, %v1623
        %v1696 = vadd.f32 %v1547, %v1624
        %v1697 = vadd.f32 %v1231, %v1625
        %v1698 = vadd.f32 %v1232, %v1626
        %v1699 = vadd.f32 %v1233, %v1627
        %v1700 = vadd.f32 %v1234, %v1628
        %v1701 = vadd.f32 %v1235, %v1629
        %v1702 = vadd.f32 %v1236, %v1630
        %v1703 = vadd.f32 %v1237, %v1631
        %v1704 = vadd.f32 %v1238, %v1632
        %v1705 = vadd.f32 %v1239, %v1633
        %v1706 = vadd.f32 %v1240, %v1634
        %v1707 = vadd.f32 %v1241, %v1635
        %v1708 = vadd.f32 %v1242, %v1636
        %v1709 = vadd.f32 %v1243, %v1637
        %v1710 = vadd.f32 %v1244, %v1638
        %v1711 = vadd.f32 %v1245, %v1639
        %v1712 = vadd.f32 %v1246, %v1640
        %v1713 = vadd.f32 %v1247, %v1641
        %v1714 = vadd.f32 %v1248, %v1642
        %v1715 = vadd.f32 %v1249, %v1643
        %v1716 = vadd.f32 %v1250, %v1644
        %v1717 = vadd.f32 %v1251, %v1645
        %v1718 = vadd.f32 %v1252, %v1646
        %v1719 = vadd.f32 %v1253, %v1647
        %v1720 = vadd.f32 %v1254, %v1648
        %v1721 = vadd.f32 %v1255, %v1649
        %v1722 = vadd.f32 %v1256, %v1650
        %v1723 = vadd.f32 %v1257, %v1651
        %v1724 = vadd.f32 %v1258, %v1652
        %v1725 = vadd.f32 %v1259, %v1653
        %v1726 = vadd.f32 %v1260, %v1654
        %v1727 = vadd.f32 %v1261, %v1655
        %v1728 = vadd.f32 %v1262, %v1656
        %v1729 = vadd.f32 %v1263, %v1657
        %v1730 = vadd.f32 %v1264, %v1658
        %v1731 = vadd.f32 %v1265, %v1659
        %v1732 = vadd.f32 %v1266, %v1660
        %v1733 = vadd.f32 %v1267, %v1661
        %v1734 = vadd.f32 %v1268, %v1662
        %v1735 = vadd.f32 %v1269, %v1663
        %v1736 = vadd.f32 %v1270, %v1664
        %v1737 = vadd.f32 %v1271, %v1665
        %v1738 = vadd.f32 %v1272, %v1666
        %v1739 = vadd.f32 %v1273, %v1667
        %v1740 = vadd.f32 %v1274, %v1668
        %v1741 = vadd.f32 %v1275, %v1669
        %v1742 = vadd.f32 %v1276, %v1670
        %v1743 = vadd.f32 %v1277, %v1671
        %v1744 = vadd.f32 %v1278, %v1672
        %v1745 = vadd.f32 %v1279, %v1673
        %v1746 = vadd.f32 %v1280, %v1674
        %v1747 = vadd.f32 %v1281, %v1675
        %v1748 = vadd.f32 %v1282, %v1676
        %v1749 = vadd.f32 %v1283, %v1677
        %v1750 = vadd.f32 %v1284, %v1678
        %v1751 = vadd.f32 %v1285, %v1679
        %v1752 = vadd.f32 %v1286, %v1680
        %v1753 = vadd.f32 %v1287, %v1681
        %v1754 = vadd.f32 %v1288, %v1682
        %v1755 = vadd.f32 %v1289, %v1683
        %v1756 = vadd.f32 %v1290, %v1684
        %v1757 = vadd.f32 %v1291, %v1685
        %v1758 = vadd.f32 %v1292, %v1686
        %v1759 = vadd.f32 %v1293, %v1687
        %v1760 = vadd.f32 %v1294, %v1688
        %v1761 = vadd.f32 %v1295, %v1689
        %v1762 = vadd.f32 %v1296, %v1690
        %v1763 = vadd.f32 %v1297, %v1691
        %v1764 = vadd.f32 %v1298, %v1692
        %v1765 = vadd.f32 %v1299, %v1693
        %v1766 = vadd.f32 %v1300, %v1694
        %v1767 = vadd.f32 %v1301, %v1695
        %v1768 = vadd.f32 %v1302, %v1696
        %v1769 = vrot.slane %v481, 7
        %v1770 = vrot.slane %v482, 7
        %v1771 = vrot.slane %v483, 7
        %v1772 = vsel %vm566, %v1770, %v1771
        %v1773 = vsel %vm566, %v1769, %v1770
        %v1774 = vsel %vm566, %v1771, %v1769
        %v1775 = vsel %vm488, 0.0, %v1774
        %v1776 = vsel %vm489, 0.0, %v1773
        %v1777 = vsel %vm490, 0.0, %v1772
        %v1778 = vrot.slane %v481, 1
        %v1779 = vrot.slane %v482, 1
        %v1780 = vrot.slane %v483, 1
        %v1781 = vsel %vm783, %v1779, %v1780
        %v1782 = vsel %vm783, %v1778, %v1779
        %v1783 = vsel %vm783, %v1780, %v1778
        %v1784 = vsel %vm491, 0.0, %v1782
        %v1785 = vsel %vm492, 0.0, %v1781
        %v1786 = vsel %vm493, 0.0, %v1783
        %s1787 = scalar_lea.vmem [#allocation8], 8
        %v1788 = vld [vmem:[%s1787] sm:$0x1]
        %v1789 = vlaneseq
        %v1790 = vshrl.u32 %v1789, 7
        %v1791 = vsub.s32 0, %v1790
        %v1792 = vrot.slane %v1788, %v1791
        %v1793 = vmul.f32 %v645, %v1792
        %v1794 = vmul.f32 %v646, %v1792
        %v1795 = vmul.f32 %v647, %v1792
        %v1796 = vmul.f32 %v648, %v1792
        %v1797 = vmul.f32 %v649, %v1792
        %v1798 = vmul.f32 %v650, %v1792
        %v1799 = vmul.f32 %v651, %v1792
        %v1800 = vmul.f32 %v652, %v1792
        %v1801 = vmul.f32 %v653, %v1792
        %v1802 = vmul.f32 %v654, %v1792
        %v1803 = vmul.f32 %v655, %v1792
        %v1804 = vmul.f32 %v656, %v1792
        %v1805 = vmul.f32 %v657, %v1792
        %v1806 = vmul.f32 %v658, %v1792
        %v1807 = vmul.f32 %v659, %v1792
        %v1808 = vmul.f32 %v660, %v1792
        %v1809 = vmul.f32 %v661, %v1792
        %v1810 = vmul.f32 %v662, %v1792
        %v1811 = vmul.f32 %v663, %v1792
        %v1812 = vmul.f32 %v664, %v1792
        %v1813 = vmul.f32 %v665, %v1792
        %v1814 = vmul.f32 %v666, %v1792
        %v1815 = vmul.f32 %v667, %v1792
        %v1816 = vmul.f32 %v668, %v1792
        %v1817 = vmul.f32 %v669, %v1792
        %v1818 = vmul.f32 %v670, %v1792
        %v1819 = vmul.f32 %v671, %v1792
        %v1820 = vmul.f32 %v672, %v1792
        %v1821 = vmul.f32 %v673, %v1792
        %v1822 = vmul.f32 %v674, %v1792
        %v1823 = vmul.f32 %v675, %v1792
        %v1824 = vmul.f32 %v676, %v1792
        %v1825 = vmul.f32 %v677, %v1792
        %v1826 = vmul.f32 %v678, %v1792
        %v1827 = vmul.f32 %v679, %v1792
        %v1828 = vmul.f32 %v680, %v1792
        %v1829 = vmul.f32 %v681, %v1792
        %v1830 = vmul.f32 %v682, %v1792
        %v1831 = vmul.f32 %v683, %v1792
        %v1832 = vmul.f32 %v684, %v1792
        %v1833 = vmul.f32 %v685, %v1792
        %v1834 = vmul.f32 %v686, %v1792
        %v1835 = vmul.f32 %v687, %v1792
        %v1836 = vmul.f32 %v688, %v1792
        %v1837 = vmul.f32 %v689, %v1792
        %v1838 = vmul.f32 %v690, %v1792
        %v1839 = vmul.f32 %v691, %v1792
        %v1840 = vmul.f32 %v692, %v1792
        %v1841 = vmul.f32 %v693, %v1792
        %v1842 = vmul.f32 %v694, %v1792
        %v1843 = vmul.f32 %v695, %v1792
        %v1844 = vmul.f32 %v696, %v1792
        %v1845 = vmul.f32 %v697, %v1792
        %v1846 = vmul.f32 %v698, %v1792
        %v1847 = vmul.f32 %v699, %v1792
        %v1848 = vmul.f32 %v700, %v1792
        %v1849 = vmul.f32 %v701, %v1792
        %v1850 = vmul.f32 %v702, %v1792
        %v1851 = vmul.f32 %v703, %v1792
        %v1852 = vmul.f32 %v704, %v1792
        %v1853 = vmul.f32 %v705, %v1792
        %v1854 = vmul.f32 %v706, %v1792
        %v1855 = vmul.f32 %v707, %v1792
        %v1856 = vmul.f32 %v708, %v1792
        %v1857 = vmul.f32 %v709, %v1792
        %v1858 = vmul.f32 %v710, %v1792
        %v1859 = vmul.f32 %v1309, %v1792
        %v1860 = vmul.f32 %v1310, %v1792
        %v1861 = vmul.f32 %v1311, %v1792
        %v1862 = vmul.f32 %v1775, %v1792
        %v1863 = vmul.f32 %v1776, %v1792
        %v1864 = vmul.f32 %v1777, %v1792
        %v1865 = vld [vmem:[%s1787 + $0x1] sm:$0x1]
        %v1866 = vlaneseq
        %v1867 = vshrl.u32 %v1866, 7
        %v1868 = vsub.s32 0, %v1867
        %v1869 = vrot.slane %v1865, %v1868
        %v1870 = vmul.f32 %v409, %v1869
        %v1871 = vmul.f32 %v410, %v1869
        %v1872 = vmul.f32 %v411, %v1869
        %v1873 = vmul.f32 %v412, %v1869
        %v1874 = vmul.f32 %v413, %v1869
        %v1875 = vmul.f32 %v414, %v1869
        %v1876 = vmul.f32 %v415, %v1869
        %v1877 = vmul.f32 %v416, %v1869
        %v1878 = vmul.f32 %v417, %v1869
        %v1879 = vmul.f32 %v418, %v1869
        %v1880 = vmul.f32 %v419, %v1869
        %v1881 = vmul.f32 %v420, %v1869
        %v1882 = vmul.f32 %v421, %v1869
        %v1883 = vmul.f32 %v422, %v1869
        %v1884 = vmul.f32 %v423, %v1869
        %v1885 = vmul.f32 %v424, %v1869
        %v1886 = vmul.f32 %v425, %v1869
        %v1887 = vmul.f32 %v426, %v1869
        %v1888 = vmul.f32 %v427, %v1869
        %v1889 = vmul.f32 %v428, %v1869
        %v1890 = vmul.f32 %v429, %v1869
        %v1891 = vmul.f32 %v430, %v1869
        %v1892 = vmul.f32 %v431, %v1869
        %v1893 = vmul.f32 %v432, %v1869
        %v1894 = vmul.f32 %v433, %v1869
        %v1895 = vmul.f32 %v434, %v1869
        %v1896 = vmul.f32 %v435, %v1869
        %v1897 = vmul.f32 %v436, %v1869
        %v1898 = vmul.f32 %v437, %v1869
        %v1899 = vmul.f32 %v438, %v1869
        %v1900 = vmul.f32 %v439, %v1869
        %v1901 = vmul.f32 %v440, %v1869
        %v1902 = vmul.f32 %v441, %v1869
        %v1903 = vmul.f32 %v442, %v1869
        %v1904 = vmul.f32 %v443, %v1869
        %v1905 = vmul.f32 %v444, %v1869
        %v1906 = vmul.f32 %v445, %v1869
        %v1907 = vmul.f32 %v446, %v1869
        %v1908 = vmul.f32 %v447, %v1869
        %v1909 = vmul.f32 %v448, %v1869
        %v1910 = vmul.f32 %v449, %v1869
        %v1911 = vmul.f32 %v450, %v1869
        %v1912 = vmul.f32 %v451, %v1869
        %v1913 = vmul.f32 %v452, %v1869
        %v1914 = vmul.f32 %v453, %v1869
        %v1915 = vmul.f32 %v454, %v1869
        %v1916 = vmul.f32 %v455, %v1869
        %v1917 = vmul.f32 %v456, %v1869
        %v1918 = vmul.f32 %v457, %v1869
        %v1919 = vmul.f32 %v458, %v1869
        %v1920 = vmul.f32 %v459, %v1869
        %v1921 = vmul.f32 %v460, %v1869
        %v1922 = vmul.f32 %v461, %v1869
        %v1923 = vmul.f32 %v462, %v1869
        %v1924 = vmul.f32 %v463, %v1869
        %v1925 = vmul.f32 %v464, %v1869
        %v1926 = vmul.f32 %v465, %v1869
        %v1927 = vmul.f32 %v466, %v1869
        %v1928 = vmul.f32 %v467, %v1869
        %v1929 = vmul.f32 %v468, %v1869
        %v1930 = vmul.f32 %v469, %v1869
        %v1931 = vmul.f32 %v470, %v1869
        %v1932 = vmul.f32 %v471, %v1869
        %v1933 = vmul.f32 %v472, %v1869
        %v1934 = vmul.f32 %v473, %v1869
        %v1935 = vmul.f32 %v474, %v1869
        %v1936 = vmul.f32 %v475, %v1869
        %v1937 = vmul.f32 %v476, %v1869
        %v1938 = vmul.f32 %v477, %v1869
        %v1939 = vmul.f32 %v481, %v1869
        %v1940 = vmul.f32 %v482, %v1869
        %v1941 = vmul.f32 %v483, %v1869
        %v1942 = vadd.f32 %v1793, %v1870
        %v1943 = vadd.f32 %v1794, %v1871
        %v1944 = vadd.f32 %v1795, %v1872
        %v1945 = vadd.f32 %v1796, %v1873
        %v1946 = vadd.f32 %v1797, %v1874
        %v1947 = vadd.f32 %v1798, %v1875
        %v1948 = vadd.f32 %v1799, %v1876
        %v1949 = vadd.f32 %v1800, %v1877
        %v1950 = vadd.f32 %v1801, %v1878
        %v1951 = vadd.f32 %v1802, %v1879
        %v1952 = vadd.f32 %v1803, %v1880
        %v1953 = vadd.f32 %v1804, %v1881
        %v1954 = vadd.f32 %v1805, %v1882
        %v1955 = vadd.f32 %v1806, %v1883
        %v1956 = vadd.f32 %v1807, %v1884
        %v1957 = vadd.f32 %v1808, %v1885
        %v1958 = vadd.f32 %v1809, %v1886
        %v1959 = vadd.f32 %v1810, %v1887
        %v1960 = vadd.f32 %v1811, %v1888
        %v1961 = vadd.f32 %v1812, %v1889
        %v1962 = vadd.f32 %v1813, %v1890
        %v1963 = vadd.f32 %v1814, %v1891
        %v1964 = vadd.f32 %v1815, %v1892
        %v1965 = vadd.f32 %v1816, %v1893
        %v1966 = vadd.f32 %v1817, %v1894
        %v1967 = vadd.f32 %v1818, %v1895
        %v1968 = vadd.f32 %v1819, %v1896
        %v1969 = vadd.f32 %v1820, %v1897
        %v1970 = vadd.f32 %v1821, %v1898
        %v1971 = vadd.f32 %v1822, %v1899
        %v1972 = vadd.f32 %v1823, %v1900
        %v1973 = vadd.f32 %v1824, %v1901
        %v1974 = vadd.f32 %v1825, %v1902
        %v1975 = vadd.f32 %v1826, %v1903
        %v1976 = vadd.f32 %v1827, %v1904
        %v1977 = vadd.f32 %v1828, %v1905
        %v1978 = vadd.f32 %v1829, %v1906
        %v1979 = vadd.f32 %v1830, %v1907
        %v1980 = vadd.f32 %v1831, %v1908
        %v1981 = vadd.f32 %v1832, %v1909
        %v1982 = vadd.f32 %v1833, %v1910
        %v1983 = vadd.f32 %v1834, %v1911
        %v1984 = vadd.f32 %v1835, %v1912
        %v1985 = vadd.f32 %v1836, %v1913
        %v1986 = vadd.f32 %v1837, %v1914
        %v1987 = vadd.f32 %v1838, %v1915
        %v1988 = vadd.f32 %v1839, %v1916
        %v1989 = vadd.f32 %v1840, %v1917
        %v1990 = vadd.f32 %v1841, %v1918
        %v1991 = vadd.f32 %v1842, %v1919
        %v1992 = vadd.f32 %v1843, %v1920
        %v1993 = vadd.f32 %v1844, %v1921
        %v1994 = vadd.f32 %v1845, %v1922
        %v1995 = vadd.f32 %v1846, %v1923
        %v1996 = vadd.f32 %v1847, %v1924
        %v1997 = vadd.f32 %v1848, %v1925
        %v1998 = vadd.f32 %v1849, %v1926
        %v1999 = vadd.f32 %v1850, %v1927
        %v2000 = vadd.f32 %v1851, %v1928
        %v2001 = vadd.f32 %v1852, %v1929
        %v2002 = vadd.f32 %v1853, %v1930
        %v2003 = vadd.f32 %v1854, %v1931
        %v2004 = vadd.f32 %v1855, %v1932
        %v2005 = vadd.f32 %v1856, %v1933
        %v2006 = vadd.f32 %v1857, %v1934
        %v2007 = vadd.f32 %v1858, %v1935
        %v2008 = vadd.f32 %v1859, %v1936
        %v2009 = vadd.f32 %v1860, %v1937
        %v2010 = vadd.f32 %v1861, %v1938
        %v2011 = vadd.f32 %v1862, %v1939
        %v2012 = vadd.f32 %v1863, %v1940
        %v2013 = vadd.f32 %v1864, %v1941
        %v2014 = vld [vmem:[%s1787 + $0x2] sm:$0x1]
        %v2015 = vlaneseq
        %v2016 = vshrl.u32 %v2015, 7
        %v2017 = vsub.s32 0, %v2016
        %v2018 = vrot.slane %v2014, %v2017
        %v2019 = vmul.f32 %v862, %v2018
        %v2020 = vmul.f32 %v863, %v2018
        %v2021 = vmul.f32 %v864, %v2018
        %v2022 = vmul.f32 %v865, %v2018
        %v2023 = vmul.f32 %v866, %v2018
        %v2024 = vmul.f32 %v867, %v2018
        %v2025 = vmul.f32 %v868, %v2018
        %v2026 = vmul.f32 %v869, %v2018
        %v2027 = vmul.f32 %v870, %v2018
        %v2028 = vmul.f32 %v871, %v2018
        %v2029 = vmul.f32 %v872, %v2018
        %v2030 = vmul.f32 %v873, %v2018
        %v2031 = vmul.f32 %v874, %v2018
        %v2032 = vmul.f32 %v875, %v2018
        %v2033 = vmul.f32 %v876, %v2018
        %v2034 = vmul.f32 %v877, %v2018
        %v2035 = vmul.f32 %v878, %v2018
        %v2036 = vmul.f32 %v879, %v2018
        %v2037 = vmul.f32 %v880, %v2018
        %v2038 = vmul.f32 %v881, %v2018
        %v2039 = vmul.f32 %v882, %v2018
        %v2040 = vmul.f32 %v883, %v2018
        %v2041 = vmul.f32 %v884, %v2018
        %v2042 = vmul.f32 %v885, %v2018
        %v2043 = vmul.f32 %v886, %v2018
        %v2044 = vmul.f32 %v887, %v2018
        %v2045 = vmul.f32 %v888, %v2018
        %v2046 = vmul.f32 %v889, %v2018
        %v2047 = vmul.f32 %v890, %v2018
        %v2048 = vmul.f32 %v891, %v2018
        %v2049 = vmul.f32 %v892, %v2018
        %v2050 = vmul.f32 %v893, %v2018
        %v2051 = vmul.f32 %v894, %v2018
        %v2052 = vmul.f32 %v895, %v2018
        %v2053 = vmul.f32 %v896, %v2018
        %v2054 = vmul.f32 %v897, %v2018
        %v2055 = vmul.f32 %v898, %v2018
        %v2056 = vmul.f32 %v899, %v2018
        %v2057 = vmul.f32 %v900, %v2018
        %v2058 = vmul.f32 %v901, %v2018
        %v2059 = vmul.f32 %v902, %v2018
        %v2060 = vmul.f32 %v903, %v2018
        %v2061 = vmul.f32 %v904, %v2018
        %v2062 = vmul.f32 %v905, %v2018
        %v2063 = vmul.f32 %v906, %v2018
        %v2064 = vmul.f32 %v907, %v2018
        %v2065 = vmul.f32 %v908, %v2018
        %v2066 = vmul.f32 %v909, %v2018
        %v2067 = vmul.f32 %v910, %v2018
        %v2068 = vmul.f32 %v911, %v2018
        %v2069 = vmul.f32 %v912, %v2018
        %v2070 = vmul.f32 %v913, %v2018
        %v2071 = vmul.f32 %v914, %v2018
        %v2072 = vmul.f32 %v915, %v2018
        %v2073 = vmul.f32 %v916, %v2018
        %v2074 = vmul.f32 %v917, %v2018
        %v2075 = vmul.f32 %v918, %v2018
        %v2076 = vmul.f32 %v919, %v2018
        %v2077 = vmul.f32 %v920, %v2018
        %v2078 = vmul.f32 %v921, %v2018
        %v2079 = vmul.f32 %v922, %v2018
        %v2080 = vmul.f32 %v923, %v2018
        %v2081 = vmul.f32 %v924, %v2018
        %v2082 = vmul.f32 %v925, %v2018
        %v2083 = vmul.f32 %v926, %v2018
        %v2084 = vmul.f32 %v927, %v2018
        %v2085 = vmul.f32 %v1318, %v2018
        %v2086 = vmul.f32 %v1319, %v2018
        %v2087 = vmul.f32 %v1320, %v2018
        %v2088 = vmul.f32 %v1784, %v2018
        %v2089 = vmul.f32 %v1785, %v2018
        %v2090 = vmul.f32 %v1786, %v2018
        %v2091 = vadd.f32 %v1942, %v2019
        %v2092 = vadd.f32 %v1943, %v2020
        %v2093 = vadd.f32 %v1944, %v2021
        %v2094 = vadd.f32 %v1945, %v2022
        %v2095 = vadd.f32 %v1946, %v2023
        %v2096 = vadd.f32 %v1947, %v2024
        %v2097 = vadd.f32 %v1948, %v2025
        %v2098 = vadd.f32 %v1949, %v2026
        %v2099 = vadd.f32 %v1950, %v2027
        %v2100 = vadd.f32 %v1951, %v2028
        %v2101 = vadd.f32 %v1952, %v2029
        %v2102 = vadd.f32 %v1953, %v2030
        %v2103 = vadd.f32 %v1954, %v2031
        %v2104 = vadd.f32 %v1955, %v2032
        %v2105 = vadd.f32 %v1956, %v2033
        %v2106 = vadd.f32 %v1957, %v2034
        %v2107 = vadd.f32 %v1958, %v2035
        %v2108 = vadd.f32 %v1959, %v2036
        %v2109 = vadd.f32 %v1960, %v2037
        %v2110 = vadd.f32 %v1961, %v2038
        %v2111 = vadd.f32 %v1962, %v2039
        %v2112 = vadd.f32 %v1963, %v2040
        %v2113 = vadd.f32 %v1964, %v2041
        %v2114 = vadd.f32 %v1965, %v2042
        %v2115 = vadd.f32 %v1966, %v2043
        %v2116 = vadd.f32 %v1967, %v2044
        %v2117 = vadd.f32 %v1968, %v2045
        %v2118 = vadd.f32 %v1969, %v2046
        %v2119 = vadd.f32 %v1970, %v2047
        %v2120 = vadd.f32 %v1971, %v2048
        %v2121 = vadd.f32 %v1972, %v2049
        %v2122 = vadd.f32 %v1973, %v2050
        %v2123 = vadd.f32 %v1974, %v2051
        %v2124 = vadd.f32 %v1975, %v2052
        %v2125 = vadd.f32 %v1976, %v2053
        %v2126 = vadd.f32 %v1977, %v2054
        %v2127 = vadd.f32 %v1978, %v2055
        %v2128 = vadd.f32 %v1979, %v2056
        %v2129 = vadd.f32 %v1980, %v2057
        %v2130 = vadd.f32 %v1981, %v2058
        %v2131 = vadd.f32 %v1982, %v2059
        %v2132 = vadd.f32 %v1983, %v2060
        %v2133 = vadd.f32 %v1984, %v2061
        %v2134 = vadd.f32 %v1985, %v2062
        %v2135 = vadd.f32 %v1986, %v2063
        %v2136 = vadd.f32 %v1987, %v2064
        %v2137 = vadd.f32 %v1988, %v2065
        %v2138 = vadd.f32 %v1989, %v2066
        %v2139 = vadd.f32 %v1990, %v2067
        %v2140 = vadd.f32 %v1991, %v2068
        %v2141 = vadd.f32 %v1992, %v2069
        %v2142 = vadd.f32 %v1993, %v2070
        %v2143 = vadd.f32 %v1994, %v2071
        %v2144 = vadd.f32 %v1995, %v2072
        %v2145 = vadd.f32 %v1996, %v2073
        %v2146 = vadd.f32 %v1997, %v2074
        %v2147 = vadd.f32 %v1998, %v2075
        %v2148 = vadd.f32 %v1999, %v2076
        %v2149 = vadd.f32 %v2000, %v2077
        %v2150 = vadd.f32 %v2001, %v2078
        %v2151 = vadd.f32 %v2002, %v2079
        %v2152 = vadd.f32 %v2003, %v2080
        %v2153 = vadd.f32 %v2004, %v2081
        %v2154 = vadd.f32 %v2005, %v2082
        %v2155 = vadd.f32 %v2006, %v2083
        %v2156 = vadd.f32 %v2007, %v2084
        %v2157 = vadd.f32 %v2008, %v2085
        %v2158 = vadd.f32 %v2009, %v2086
        %v2159 = vadd.f32 %v2010, %v2087
        %v2160 = vadd.f32 %v2011, %v2088
        %v2161 = vadd.f32 %v2012, %v2089
        %v2162 = vadd.f32 %v2013, %v2090
        %v2163 = vadd.f32 %v1697, %v2091
        %v2164 = vadd.f32 %v1698, %v2092
        %v2165 = vadd.f32 %v1699, %v2093
        %v2166 = vadd.f32 %v1700, %v2094
        %v2167 = vadd.f32 %v1701, %v2095
        %v2168 = vadd.f32 %v1702, %v2096
        %v2169 = vadd.f32 %v1703, %v2097
        %v2170 = vadd.f32 %v1704, %v2098
        %v2171 = vadd.f32 %v1705, %v2099
        %v2172 = vadd.f32 %v1706, %v2100
        %v2173 = vadd.f32 %v1707, %v2101
        %v2174 = vadd.f32 %v1708, %v2102
        %v2175 = vadd.f32 %v1709, %v2103
        %v2176 = vadd.f32 %v1710, %v2104
        %v2177 = vadd.f32 %v1711, %v2105
        %v2178 = vadd.f32 %v1712, %v2106
        %v2179 = vadd.f32 %v1713, %v2107
        %v2180 = vadd.f32 %v1714, %v2108
        %v2181 = vadd.f32 %v1715, %v2109
        %v2182 = vadd.f32 %v1716, %v2110
        %v2183 = vadd.f32 %v1717, %v2111
        %v2184 = vadd.f32 %v1718, %v2112
        %v2185 = vadd.f32 %v1719, %v2113
        %v2186 = vadd.f32 %v1720, %v2114
        %v2187 = vadd.f32 %v1721, %v2115
        %v2188 = vadd.f32 %v1722, %v2116
        %v2189 = vadd.f32 %v1723, %v2117
        %v2190 = vadd.f32 %v1724, %v2118
        %v2191 = vadd.f32 %v1725, %v2119
        %v2192 = vadd.f32 %v1726, %v2120
        %v2193 = vadd.f32 %v1727, %v2121
        %v2194 = vadd.f32 %v1728, %v2122
        %v2195 = vadd.f32 %v1729, %v2123
        %v2196 = vadd.f32 %v1730, %v2124
        %v2197 = vadd.f32 %v1731, %v2125
        %v2198 = vadd.f32 %v1732, %v2126
        %v2199 = vadd.f32 %v1733, %v2127
        %v2200 = vadd.f32 %v1734, %v2128
        %v2201 = vadd.f32 %v1735, %v2129
        %v2202 = vadd.f32 %v1736, %v2130
        %v2203 = vadd.f32 %v1737, %v2131
        %v2204 = vadd.f32 %v1738, %v2132
        %v2205 = vadd.f32 %v1739, %v2133
        %v2206 = vadd.f32 %v1740, %v2134
        %v2207 = vadd.f32 %v1741, %v2135
        %v2208 = vadd.f32 %v1742, %v2136
        %v2209 = vadd.f32 %v1743, %v2137
        %v2210 = vadd.f32 %v1744, %v2138
        %v2211 = vadd.f32 %v1745, %v2139
        %v2212 = vadd.f32 %v1746, %v2140
        %v2213 = vadd.f32 %v1747, %v2141
        %v2214 = vadd.f32 %v1748, %v2142
        %v2215 = vadd.f32 %v1749, %v2143
        %v2216 = vadd.f32 %v1750, %v2144
        %v2217 = vadd.f32 %v1751, %v2145
        %v2218 = vadd.f32 %v1752, %v2146
        %v2219 = vadd.f32 %v1753, %v2147
        %v2220 = vadd.f32 %v1754, %v2148
        %v2221 = vadd.f32 %v1755, %v2149
        %v2222 = vadd.f32 %v1756, %v2150
        %v2223 = vadd.f32 %v1757, %v2151
        %v2224 = vadd.f32 %v1758, %v2152
        %v2225 = vadd.f32 %v1759, %v2153
        %v2226 = vadd.f32 %v1760, %v2154
        %v2227 = vadd.f32 %v1761, %v2155
        %v2228 = vadd.f32 %v1762, %v2156
        %v2229 = vadd.f32 %v1763, %v2157
        %v2230 = vadd.f32 %v1764, %v2158
        %v2231 = vadd.f32 %v1765, %v2159
        %v2232 = vadd.f32 %v1766, %v2160
        %v2233 = vadd.f32 %v1767, %v2161
        %v2234 = vadd.f32 %v1768, %v2162
        %v2235 = vpack.c.bf16 %v2164, %v2163
        %v2236 = vpack.c.bf16 %v2166, %v2165
        %v2237 = vpack.c.bf16 %v2168, %v2167
        %v2238 = vpack.c.bf16 %v2170, %v2169
        %v2239 = vpack.c.bf16 %v2172, %v2171
        %v2240 = vpack.c.bf16 %v2174, %v2173
        %v2241 = vpack.c.bf16 %v2176, %v2175
        %v2242 = vpack.c.bf16 %v2178, %v2177
        %v2243 = vpack.c.bf16 %v2180, %v2179
        %v2244 = vpack.c.bf16 %v2182, %v2181
        %v2245 = vpack.c.bf16 %v2184, %v2183
        %v2246 = vpack.c.bf16 %v2186, %v2185
        %v2247 = vpack.c.bf16 %v2188, %v2187
        %v2248 = vpack.c.bf16 %v2190, %v2189
        %v2249 = vpack.c.bf16 %v2192, %v2191
        %v2250 = vpack.c.bf16 %v2194, %v2193
        %v2251 = vpack.c.bf16 %v2196, %v2195
        %v2252 = vpack.c.bf16 %v2198, %v2197
        %v2253 = vpack.c.bf16 %v2200, %v2199
        %v2254 = vpack.c.bf16 %v2202, %v2201
        %v2255 = vpack.c.bf16 %v2204, %v2203
        %v2256 = vpack.c.bf16 %v2206, %v2205
        %v2257 = vpack.c.bf16 %v2208, %v2207
        %v2258 = vpack.c.bf16 %v2210, %v2209
        %v2259 = vpack.c.bf16 %v2212, %v2211
        %v2260 = vpack.c.bf16 %v2214, %v2213
        %v2261 = vpack.c.bf16 %v2216, %v2215
        %v2262 = vpack.c.bf16 %v2218, %v2217
        %v2263 = vpack.c.bf16 %v2220, %v2219
        %v2264 = vpack.c.bf16 %v2222, %v2221
        %v2265 = vpack.c.bf16 %v2224, %v2223
        %v2266 = vpack.c.bf16 %v2226, %v2225
        %v2267 = vpack.c.bf16 %v2228, %v2227
        %v2268 = vpack.c.bf16 %v2230, %v2229
        %v2269 = vpack.c.bf16 %v2232, %v2231
        %v2270 = vpack.c.bf16 %v2234, %v2233
        %v2271 = vld [vmem:[#allocation10] sm:$0xf]
        %v2272 = vld [vmem:[#allocation10 + $0x4] sm:$0xf]
        %v2273 = vld [vmem:[#allocation10 + $0x8] sm:$0xf]
        %v2274 = vld [vmem:[#allocation10 + $0xc] sm:$0xf]
        %v2275 = vld [vmem:[#allocation10 + $0x10] sm:$0xf]
        %v2276 = vld [vmem:[#allocation10 + $0x14] sm:$0xf]
        %v2277 = vld [vmem:[#allocation10 + $0x18] sm:$0xf]
        %v2278 = vld [vmem:[#allocation10 + $0x1c] sm:$0xf]
        %v2279 = vld [vmem:[#allocation10 + $0x20] sm:$0xf]
        %v2280 = vld [vmem:[#allocation10 + $0x24] sm:$0xf]
        %v2281 = vld [vmem:[#allocation10 + $0x28] sm:$0xf]
        %v2282 = vld [vmem:[#allocation10 + $0x2c] sm:$0xf]
        %v2283 = vld [vmem:[#allocation10 + $0x30] sm:$0xf]
        %v2284 = vld [vmem:[#allocation10 + $0x34] sm:$0xf]
        %v2285 = vld [vmem:[#allocation10 + $0x38] sm:$0xf]
        %v2286 = vld [vmem:[#allocation10 + $0x3c] sm:$0xf]
        %v2287 = vld [vmem:[%s5] sm:$0x1]
        %v2289 = vlaneseq
        %v2290 = vshrl.u32 %v2289, 7
        %v2291 = vsub.s32 0, %v2290
        %v2292 = vrot.slane %v2287, %v2291
        %v2310 = vunpack.c.l.b16 %v2271
        %v2311 = vunpack.c.l.b16 %v2272
        %v2312 = vunpack.c.l.b16 %v2273
        %v2313 = vunpack.c.l.b16 %v2274
        %v2314 = vunpack.c.l.b16 %v2275
        %v2315 = vunpack.c.l.b16 %v2276
        %v2316 = vunpack.c.l.b16 %v2277
        %v2317 = vunpack.c.l.b16 %v2278
        %v2318 = vunpack.c.l.b16 %v2279
        %v2319 = vunpack.c.l.b16 %v2280
        %v2320 = vunpack.c.l.b16 %v2281
        %v2321 = vunpack.c.l.b16 %v2282
        %v2322 = vunpack.c.l.b16 %v2283
        %v2323 = vunpack.c.l.b16 %v2284
        %v2324 = vunpack.c.l.b16 %v2285
        %v2325 = vunpack.c.l.b16 %v2286
        %v2326 = vpack.c.b16 %v2311, %v2310
        %v2327 = vpack.c.b16 %v2313, %v2312
        %v2328 = vpack.c.b16 %v2315, %v2314
        %v2329 = vpack.c.b16 %v2317, %v2316
        %v2330 = vpack.c.b16 %v2319, %v2318
        %v2331 = vpack.c.b16 %v2321, %v2320
        %v2332 = vpack.c.b16 %v2323, %v2322
        %v2333 = vpack.c.b16 %v2325, %v2324
        %2342 = vmatprep.subr.bf16.mxu0 0
        %2343 = vmatpush1.bf16.msra.mxu0 %v2326
        %2344 = vmatprep.subr.bf16.mxu0 0
        %2345 = vmatpush1.bf16.msra.mxu0 %v2327
        %2346 = vmatprep.subr.bf16.mxu0 0
        %2347 = vmatpush1.bf16.msra.mxu0 %v2328
        %2348 = vmatprep.subr.bf16.mxu0 0
        %2349 = vmatpush1.bf16.msra.mxu0 %v2329
        %2350 = vmatprep.subr.bf16.mxu0 0
        %2351 = vmatpush1.bf16.msra.mxu0 %v2330
        %2352 = vmatprep.subr.bf16.mxu0 0
        %2353 = vmatpush1.bf16.msra.mxu0 %v2331
        %2354 = vmatprep.subr.bf16.mxu0 0
        %2355 = vmatpush1.bf16.msra.mxu0 %v2332
        %2356 = vmatprep.subr.bf16.mxu0 0
        %2357 = vmatpush1.bf16.msra.mxu0 %v2333
        %2358 = vmatprep.subr.bf16.mxu0 0
        %2359 = vmatpush1.bf16.msra.mxu0 0
        %2360 = vmatprep.subr.bf16.mxu0 0
        %2361 = vmatpush1.bf16.msra.mxu0 0
        %2362 = vmatprep.subr.bf16.mxu0 0
        %2363 = vmatpush1.bf16.msra.mxu0 0
        %2364 = vmatprep.subr.bf16.mxu0 0
        %2365 = vmatpush1.bf16.msra.mxu0 0
        %2366 = vmatprep.subr.bf16.mxu0 0
        %2367 = vmatpush1.bf16.msra.mxu0 0
        %2368 = vmatprep.subr.bf16.mxu0 0
        %2369 = vmatpush1.bf16.msra.mxu0 0
        %2370 = vmatprep.subr.bf16.mxu0 0
        %2371 = vmatpush1.bf16.msra.mxu0 0
        %2372 = vmatprep.subr.bf16.mxu0 0
        %2373 = vmatpush1.bf16.msra.mxu0 0
        %2374 = vmatprep.mubr.bf16.mxu0 0
        %2375 = vmatmul.mubr.bf16.gmra.mrb[0].mxu0 %v2235
        %v2376 = vpop.f32.mrb[0].mxu0
        %v2377 = vadd.f32 %v2292, %v2376
        %v2378 = vpop.f32.mrb[0].mxu0
        %v2379 = vpop.f32.mrb[0].mxu0
        %v2380 = vadd.f32 %v2292, %v2379
        %v2381 = vpop.f32.mrb[0].mxu0
        %2382 = vmatprep.mubr.bf16.mxu0 0
        %2383 = vmatmul.mubr.bf16.gmra.mrb[0].mxu0 %v2236
        %v2384 = vpop.f32.mrb[0].mxu0
        %v2385 = vadd.f32 %v2292, %v2384
        %v2386 = vpop.f32.mrb[0].mxu0
        %v2387 = vpop.f32.mrb[0].mxu0
        %v2388 = vadd.f32 %v2292, %v2387
        %v2389 = vpop.f32.mrb[0].mxu0
        %2390 = vmatprep.mubr.bf16.mxu0 0
        %2391 = vmatmul.mubr.bf16.gmra.mrb[0].mxu0 %v2237
        %v2392 = vpop.f32.mrb[0].mxu0
        %v2393 = vadd.f32 %v2292, %v2392
        %v2394 = vpop.f32.mrb[0].mxu0
        %v2395 = vpop.f32.mrb[0].mxu0
        %v2396 = vadd.f32 %v2292, %v2395
        %v2397 = vpop.f32.mrb[0].mxu0
        %2398 = vmatprep.mubr.bf16.mxu0 0
        %2399 = vmatmul.mubr.bf16.gmra.mrb[0].mxu0 %v2238
        %v2400 = vpop.f32.mrb[0].mxu0
        %v2401 = vadd.f32 %v2292, %v2400
        %v2402 = vpop.f32.mrb[0].mxu0
        %v2403 = vpop.f32.mrb[0].mxu0
        %v2404 = vadd.f32 %v2292, %v2403
        %v2405 = vpop.f32.mrb[0].mxu0
        %2406 = vmatprep.mubr.bf16.mxu0 0
        %2407 = vmatmul.mubr.bf16.gmra.mrb[0].mxu0 %v2239
        %v2408 = vpop.f32.mrb[0].mxu0
        %v2409 = vadd.f32 %v2292, %v2408
        %v2410 = vpop.f32.mrb[0].mxu0
        %v2411 = vpop.f32.mrb[0].mxu0
        %v2412 = vadd.f32 %v2292, %v2411
        %v2413 = vpop.f32.mrb[0].mxu0
        %2414 = vmatprep.mubr.bf16.mxu0 0
        %2415 = vmatmul.mubr.bf16.gmra.mrb[0].mxu0 %v2240
        %v2416 = vpop.f32.mrb[0].mxu0
        %v2417 = vadd.f32 %v2292, %v2416
        %v2418 = vpop.f32.mrb[0].mxu0
        %v2419 = vpop.f32.mrb[0].mxu0
        %v2420 = vadd.f32 %v2292, %v2419
        %v2421 = vpop.f32.mrb[0].mxu0
        %2422 = vmatprep.mubr.bf16.mxu0 0
        %2423 = vmatmul.mubr.bf16.gmra.mrb[0].mxu0 %v2241
        %v2424 = vpop.f32.mrb[0].mxu0
        %v2425 = vadd.f32 %v2292, %v2424
        %v2426 = vpop.f32.mrb[0].mxu0
        %v2427 = vpop.f32.mrb[0].mxu0
        %v2428 = vadd.f32 %v2292, %v2427
        %v2429 = vpop.f32.mrb[0].mxu0
        %2430 = vmatprep.mubr.bf16.mxu0 0
        %2431 = vmatmul.mubr.bf16.gmra.mrb[0].mxu0 %v2242
        %v2432 = vpop.f32.mrb[0].mxu0
        %v2433 = vadd.f32 %v2292, %v2432
        %v2434 = vpop.f32.mrb[0].mxu0
        %v2435 = vpop.f32.mrb[0].mxu0
        %v2436 = vadd.f32 %v2292, %v2435
        %v2437 = vpop.f32.mrb[0].mxu0
        %2438 = vmatprep.mubr.bf16.mxu0 0
        %2439 = vmatmul.mubr.bf16.gmra.mrb[0].mxu0 %v2243
        %v2440 = vpop.f32.mrb[0].mxu0
        %v2441 = vadd.f32 %v2292, %v2440
        %v2442 = vpop.f32.mrb[0].mxu0
        %v2443 = vpop.f32.mrb[0].mxu0
        %v2444 = vadd.f32 %v2292, %v2443
        %v2445 = vpop.f32.mrb[0].mxu0
        %2446 = vmatprep.mubr.bf16.mxu0 0
        %2447 = vmatmul.mubr.bf16.gmra.mrb[0].mxu0 %v2244
        %v2448 = vpop.f32.mrb[0].mxu0
        %v2449 = vadd.f32 %v2292, %v2448
        %v2450 = vpop.f32.mrb[0].mxu0
        %v2451 = vpop.f32.mrb[0].mxu0
        %v2452 = vadd.f32 %v2292, %v2451
        %v2453 = vpop.f32.mrb[0].mxu0
        %2454 = vmatprep.mubr.bf16.mxu0 0
        %2455 = vmatmul.mubr.bf16.gmra.mrb[0].mxu0 %v2245
        %v2456 = vpop.f32.mrb[0].mxu0
        %v2457 = vadd.f32 %v2292, %v2456
        %v2458 = vpop.f32.mrb[0].mxu0
        %v2459 = vpop.f32.mrb[0].mxu0
        %v2460 = vadd.f32 %v2292, %v2459
        %v2461 = vpop.f32.mrb[0].mxu0
        %2462 = vmatprep.mubr.bf16.mxu0 0
        %2463 = vmatmul.mubr.bf16.gmra.mrb[0].mxu0 %v2246
        %v2464 = vpop.f32.mrb[0].mxu0
        %v2465 = vadd.f32 %v2292, %v2464
        %v2466 = vpop.f32.mrb[0].mxu0
        %v2467 = vpop.f32.mrb[0].mxu0
        %v2468 = vadd.f32 %v2292, %v2467
        %v2469 = vpop.f32.mrb[0].mxu0
        %2470 = vmatprep.mubr.bf16.mxu0 0
        %2471 = vmatmul.mubr.bf16.gmra.mrb[0].mxu0 %v2247
        %v2472 = vpop.f32.mrb[0].mxu0
        %v2473 = vadd.f32 %v2292, %v2472
        %v2474 = vpop.f32.mrb[0].mxu0
        %v2475 = vpop.f32.mrb[0].mxu0
        %v2476 = vadd.f32 %v2292, %v2475
        %v2477 = vpop.f32.mrb[0].mxu0
        %2478 = vmatprep.mubr.bf16.mxu0 0
        %2479 = vmatmul.mubr.bf16.gmra.mrb[0].mxu0 %v2248
        %v2480 = vpop.f32.mrb[0].mxu0
        %v2481 = vadd.f32 %v2292, %v2480
        %v2482 = vpop.f32.mrb[0].mxu0
        %v2483 = vpop.f32.mrb[0].mxu0
        %v2484 = vadd.f32 %v2292, %v2483
        %v2485 = vpop.f32.mrb[0].mxu0
        %2486 = vmatprep.mubr.bf16.mxu0 0
        %2487 = vmatmul.mubr.bf16.gmra.mrb[0].mxu0 %v2249
        %v2488 = vpop.f32.mrb[0].mxu0
        %v2489 = vadd.f32 %v2292, %v2488
        %v2490 = vpop.f32.mrb[0].mxu0
        %v2491 = vpop.f32.mrb[0].mxu0
        %v2492 = vadd.f32 %v2292, %v2491
        %v2493 = vpop.f32.mrb[0].mxu0
        %2494 = vmatprep.mubr.bf16.mxu0 0
        %2495 = vmatmul.mubr.bf16.gmra.mrb[0].mxu0 %v2250
        %v2496 = vpop.f32.mrb[0].mxu0
        %v2497 = vadd.f32 %v2292, %v2496
        %v2498 = vpop.f32.mrb[0].mxu0
        %v2499 = vpop.f32.mrb[0].mxu0
        %v2500 = vadd.f32 %v2292, %v2499
        %v2501 = vpop.f32.mrb[0].mxu0
        %2502 = vmatprep.mubr.bf16.mxu0 0
        %2503 = vmatmul.mubr.bf16.gmra.mrb[0].mxu0 %v2251
        %v2504 = vpop.f32.mrb[0].mxu0
        %v2505 = vadd.f32 %v2292, %v2504
        %v2506 = vpop.f32.mrb[0].mxu0
        %v2507 = vpop.f32.mrb[0].mxu0
        %v2508 = vadd.f32 %v2292, %v2507
        %v2509 = vpop.f32.mrb[0].mxu0
        %2510 = vmatprep.mubr.bf16.mxu0 0
        %2511 = vmatmul.mubr.bf16.gmra.mrb[0].mxu0 %v2252
        %v2512 = vpop.f32.mrb[0].mxu0
        %v2513 = vadd.f32 %v2292, %v2512
        %v2514 = vpop.f32.mrb[0].mxu0
        %v2515 = vpop.f32.mrb[0].mxu0
        %v2516 = vadd.f32 %v2292, %v2515
        %v2517 = vpop.f32.mrb[0].mxu0
        %2518 = vmatprep.mubr.bf16.mxu0 0
        %2519 = vmatmul.mubr.bf16.gmra.mrb[0].mxu0 %v2253
        %v2520 = vpop.f32.mrb[0].mxu0
        %v2521 = vadd.f32 %v2292, %v2520
        %v2522 = vpop.f32.mrb[0].mxu0
        %v2523 = vpop.f32.mrb[0].mxu0
        %v2524 = vadd.f32 %v2292, %v2523
        %v2525 = vpop.f32.mrb[0].mxu0
        %2526 = vmatprep.mubr.bf16.mxu0 0
        %2527 = vmatmul.mubr.bf16.gmra.mrb[0].mxu0 %v2254
        %v2528 = vpop.f32.mrb[0].mxu0
        %v2529 = vadd.f32 %v2292, %v2528
        %v2530 = vpop.f32.mrb[0].mxu0
        %v2531 = vpop.f32.mrb[0].mxu0
        %v2532 = vadd.f32 %v2292, %v2531
        %v2533 = vpop.f32.mrb[0].mxu0
        %2534 = vmatprep.mubr.bf16.mxu0 0
        %2535 = vmatmul.mubr.bf16.gmra.mrb[0].mxu0 %v2255
        %v2536 = vpop.f32.mrb[0].mxu0
        %v2537 = vadd.f32 %v2292, %v2536
        %v2538 = vpop.f32.mrb[0].mxu0
        %v2539 = vpop.f32.mrb[0].mxu0
        %v2540 = vadd.f32 %v2292, %v2539
        %v2541 = vpop.f32.mrb[0].mxu0
        %2542 = vmatprep.mubr.bf16.mxu0 0
        %2543 = vmatmul.mubr.bf16.gmra.mrb[0].mxu0 %v2256
        %v2544 = vpop.f32.mrb[0].mxu0
        %v2545 = vadd.f32 %v2292, %v2544
        %v2546 = vpop.f32.mrb[0].mxu0
        %v2547 = vpop.f32.mrb[0].mxu0
        %v2548 = vadd.f32 %v2292, %v2547
        %v2549 = vpop.f32.mrb[0].mxu0
        %2550 = vmatprep.mubr.bf16.mxu0 0
        %2551 = vmatmul.mubr.bf16.gmra.mrb[0].mxu0 %v2257
        %v2552 = vpop.f32.mrb[0].mxu0
        %v2553 = vadd.f32 %v2292, %v2552
        %v2554 = vpop.f32.mrb[0].mxu0
        %v2555 = vpop.f32.mrb[0].mxu0
        %v2556 = vadd.f32 %v2292, %v2555
        %v2557 = vpop.f32.mrb[0].mxu0
        %2558 = vmatprep.mubr.bf16.mxu0 0
        %2559 = vmatmul.mubr.bf16.gmra.mrb[0].mxu0 %v2258
        %v2560 = vpop.f32.mrb[0].mxu0
        %v2561 = vadd.f32 %v2292, %v2560
        %v2562 = vpop.f32.mrb[0].mxu0
        %v2563 = vpop.f32.mrb[0].mxu0
        %v2564 = vadd.f32 %v2292, %v2563
        %v2565 = vpop.f32.mrb[0].mxu0
        %2566 = vmatprep.mubr.bf16.mxu0 0
        %2567 = vmatmul.mubr.bf16.gmra.mrb[0].mxu0 %v2259
        %v2568 = vpop.f32.mrb[0].mxu0
        %v2569 = vadd.f32 %v2292, %v2568
        %v2570 = vpop.f32.mrb[0].mxu0
        %v2571 = vpop.f32.mrb[0].mxu0
        %v2572 = vadd.f32 %v2292, %v2571
        %v2573 = vpop.f32.mrb[0].mxu0
        %2574 = vmatprep.mubr.bf16.mxu0 0
        %2575 = vmatmul.mubr.bf16.gmra.mrb[0].mxu0 %v2260
        %v2576 = vpop.f32.mrb[0].mxu0
        %v2577 = vadd.f32 %v2292, %v2576
        %v2578 = vpop.f32.mrb[0].mxu0
        %v2579 = vpop.f32.mrb[0].mxu0
        %v2580 = vadd.f32 %v2292, %v2579
        %v2581 = vpop.f32.mrb[0].mxu0
        %2582 = vmatprep.mubr.bf16.mxu0 0
        %2583 = vmatmul.mubr.bf16.gmra.mrb[0].mxu0 %v2261
        %v2584 = vpop.f32.mrb[0].mxu0
        %v2585 = vadd.f32 %v2292, %v2584
        %v2586 = vpop.f32.mrb[0].mxu0
        %v2587 = vpop.f32.mrb[0].mxu0
        %v2588 = vadd.f32 %v2292, %v2587
        %v2589 = vpop.f32.mrb[0].mxu0
        %2590 = vmatprep.mubr.bf16.mxu0 0
        %2591 = vmatmul.mubr.bf16.gmra.mrb[0].mxu0 %v2262
        %v2592 = vpop.f32.mrb[0].mxu0
        %v2593 = vadd.f32 %v2292, %v2592
        %v2594 = vpop.f32.mrb[0].mxu0
        %v2595 = vpop.f32.mrb[0].mxu0
        %v2596 = vadd.f32 %v2292, %v2595
        %v2597 = vpop.f32.mrb[0].mxu0
        %2598 = vmatprep.mubr.bf16.mxu0 0
        %2599 = vmatmul.mubr.bf16.gmra.mrb[0].mxu0 %v2263
        %v2600 = vpop.f32.mrb[0].mxu0
        %v2601 = vadd.f32 %v2292, %v2600
        %v2602 = vpop.f32.mrb[0].mxu0
        %v2603 = vpop.f32.mrb[0].mxu0
        %v2604 = vadd.f32 %v2292, %v2603
        %v2605 = vpop.f32.mrb[0].mxu0
        %2606 = vmatprep.mubr.bf16.mxu0 0
        %2607 = vmatmul.mubr.bf16.gmra.mrb[0].mxu0 %v2264
        %v2608 = vpop.f32.mrb[0].mxu0
        %v2609 = vadd.f32 %v2292, %v2608
        %v2610 = vpop.f32.mrb[0].mxu0
        %v2611 = vpop.f32.mrb[0].mxu0
        %v2612 = vadd.f32 %v2292, %v2611
        %v2613 = vpop.f32.mrb[0].mxu0
        %2614 = vmatprep.mubr.bf16.mxu0 0
        %2615 = vmatmul.mubr.bf16.gmra.mrb[0].mxu0 %v2265
        %v2616 = vpop.f32.mrb[0].mxu0
        %v2617 = vadd.f32 %v2292, %v2616
        %v2618 = vpop.f32.mrb[0].mxu0
        %v2619 = vpop.f32.mrb[0].mxu0
        %v2620 = vadd.f32 %v2292, %v2619
        %v2621 = vpop.f32.mrb[0].mxu0
        %2622 = vmatprep.mubr.bf16.mxu0 0
        %2623 = vmatmul.mubr.bf16.gmra.mrb[0].mxu0 %v2266
        %v2624 = vpop.f32.mrb[0].mxu0
        %v2625 = vadd.f32 %v2292, %v2624
        %v2626 = vpop.f32.mrb[0].mxu0
        %v2627 = vpop.f32.mrb[0].mxu0
        %v2628 = vadd.f32 %v2292, %v2627
        %v2629 = vpop.f32.mrb[0].mxu0
        %2630 = vmatprep.mubr.bf16.mxu0 0
        %2631 = vmatmul.mubr.bf16.gmra.mrb[0].mxu0 %v2267
        %v2632 = vpop.f32.mrb[0].mxu0
        %v2633 = vadd.f32 %v2292, %v2632
        %v2634 = vpop.f32.mrb[0].mxu0
        %v2635 = vpop.f32.mrb[0].mxu0
        %v2636 = vadd.f32 %v2292, %v2635
        %v2637 = vpop.f32.mrb[0].mxu0
        %2638 = vmatprep.mubr.bf16.mxu0 0
        %2639 = vmatmul.mubr.bf16.gmra.mrb[0].mxu0 %v2268
        %v2640 = vpop.f32.mrb[0].mxu0
        %v2641 = vadd.f32 %v2292, %v2640
        %v2642 = vpop.f32.mrb[0].mxu0
        %v2643 = vpop.f32.mrb[0].mxu0
        %v2644 = vadd.f32 %v2292, %v2643
        %v2645 = vpop.f32.mrb[0].mxu0
        %2646 = vmatprep.mubr.bf16.mxu0 0
        %2647 = vmatmul.mubr.bf16.gmra.mrb[0].mxu0 %v2269
        %v2648 = vpop.f32.mrb[0].mxu0
        %v2649 = vadd.f32 %v2292, %v2648
        %v2650 = vpop.f32.mrb[0].mxu0
        %v2651 = vpop.f32.mrb[0].mxu0
        %v2652 = vadd.f32 %v2292, %v2651
        %v2653 = vpop.f32.mrb[0].mxu0
        %2654 = vmatprep.mubr.bf16.mxu0 0
        %2655 = vmatmul.mubr.bf16.gmra.mrb[0].mxu0 %v2270
        %v2656 = vpop.f32.mrb[0].mxu0
        %v2657 = vadd.f32 %v2292, %v2656
        %v2658 = vpop.f32.mrb[0].mxu0
        %v2659 = vpop.f32.mrb[0].mxu0
        %v2660 = vadd.f32 %v2292, %v2659
        %v2661 = vpop.f32.mrb[0].mxu0
        %2662 = vdwg.mxu0
        %v2663 = vmax.f32 %v2377, 0.0
        %v2664 = vmax.f32 %v2380, 0.0
        %v2665 = vmax.f32 %v2385, 0.0
        %v2666 = vmax.f32 %v2388, 0.0
        %v2667 = vmax.f32 %v2393, 0.0
        %v2668 = vmax.f32 %v2396, 0.0
        %v2669 = vmax.f32 %v2401, 0.0
        %v2670 = vmax.f32 %v2404, 0.0
        %v2671 = vmax.f32 %v2409, 0.0
        %v2672 = vmax.f32 %v2412, 0.0
        %v2673 = vmax.f32 %v2417, 0.0
        %v2674 = vmax.f32 %v2420, 0.0
        %v2675 = vmax.f32 %v2425, 0.0
        %v2676 = vmax.f32 %v2428, 0.0
        %v2677 = vmax.f32 %v2433, 0.0
        %v2678 = vmax.f32 %v2436, 0.0
        %v2679 = vmax.f32 %v2441, 0.0
        %v2680 = vmax.f32 %v2444, 0.0
        %v2681 = vmax.f32 %v2449, 0.0
        %v2682 = vmax.f32 %v2452, 0.0
        %v2683 = vmax.f32 %v2457, 0.0
        %v2684 = vmax.f32 %v2460, 0.0
        %v2685 = vmax.f32 %v2465, 0.0
        %v2686 = vmax.f32 %v2468, 0.0
        %v2687 = vmax.f32 %v2473, 0.0
        %v2688 = vmax.f32 %v2476, 0.0
        %v2689 = vmax.f32 %v2481, 0.0
        %v2690 = vmax.f32 %v2484, 0.0
        %v2691 = vmax.f32 %v2489, 0.0
        %v2692 = vmax.f32 %v2492, 0.0
        %v2693 = vmax.f32 %v2497, 0.0
        %v2694 = vmax.f32 %v2500, 0.0
        %v2695 = vmax.f32 %v2505, 0.0
        %v2696 = vmax.f32 %v2508, 0.0
        %v2697 = vmax.f32 %v2513, 0.0
        %v2698 = vmax.f32 %v2516, 0.0
        %v2699 = vmax.f32 %v2521, 0.0
        %v2700 = vmax.f32 %v2524, 0.0
        %v2701 = vmax.f32 %v2529, 0.0
        %v2702 = vmax.f32 %v2532, 0.0
        %v2703 = vmax.f32 %v2537, 0.0
        %v2704 = vmax.f32 %v2540, 0.0
        %v2705 = vmax.f32 %v2545, 0.0
        %v2706 = vmax.f32 %v2548, 0.0
        %v2707 = vmax.f32 %v2553, 0.0
        %v2708 = vmax.f32 %v2556, 0.0
        %v2709 = vmax.f32 %v2561, 0.0
        %v2710 = vmax.f32 %v2564, 0.0
        %v2711 = vmax.f32 %v2569, 0.0
        %v2712 = vmax.f32 %v2572, 0.0
        %v2713 = vmax.f32 %v2577, 0.0
        %v2714 = vmax.f32 %v2580, 0.0
        %v2715 = vmax.f32 %v2585, 0.0
        %v2716 = vmax.f32 %v2588, 0.0
        %v2717 = vmax.f32 %v2593, 0.0
        %v2718 = vmax.f32 %v2596, 0.0
        %v2719 = vmax.f32 %v2601, 0.0
        %v2720 = vmax.f32 %v2604, 0.0
        %v2721 = vmax.f32 %v2609, 0.0
        %v2722 = vmax.f32 %v2612, 0.0
        %v2723 = vmax.f32 %v2617, 0.0
        %v2724 = vmax.f32 %v2620, 0.0
        %v2725 = vmax.f32 %v2625, 0.0
        %v2726 = vmax.f32 %v2628, 0.0
        %v2727 = vmax.f32 %v2633, 0.0
        %v2728 = vmax.f32 %v2636, 0.0
        %v2729 = vmax.f32 %v2641, 0.0
        %v2730 = vmax.f32 %v2644, 0.0
        %v2731 = vmax.f32 %v2649, 0.0
        %v2732 = vmax.f32 %v2652, 0.0
        %v2733 = vmax.f32 %v2657, 0.0
        %v2734 = vmax.f32 %v2660, 0.0
        %2735 = vst [vmem:[%s402] sm:$0xff] %v2663
        %2736 = vst [vmem:[%s402 + $0x8] sm:$0xff] %v2664
        %2737 = vst [vmem:[%s402 + $0x10] sm:$0xff] %v2665
        %2738 = vst [vmem:[%s402 + $0x18] sm:$0xff] %v2666
        %2739 = vst [vmem:[%s402 + $0x20] sm:$0xff] %v2667
        %2740 = vst [vmem:[%s402 + $0x28] sm:$0xff] %v2668
        %2741 = vst [vmem:[%s402 + $0x30] sm:$0xff] %v2669
        %2742 = vst [vmem:[%s402 + $0x38] sm:$0xff] %v2670
        %2743 = vst [vmem:[%s402 + $0x40] sm:$0xff] %v2671
        %2744 = vst [vmem:[%s402 + $0x48] sm:$0xff] %v2672
        %2745 = vst [vmem:[%s402 + $0x50] sm:$0xff] %v2673
        %2746 = vst [vmem:[%s402 + $0x58] sm:$0xff] %v2674
        %2747 = vst [vmem:[%s402 + $0x60] sm:$0xff] %v2675
        %2748 = vst [vmem:[%s402 + $0x68] sm:$0xff] %v2676
        %2749 = vst [vmem:[%s402 + $0x70] sm:$0xff] %v2677
        %2750 = vst [vmem:[%s402 + $0x78] sm:$0xff] %v2678
        %2751 = vst [vmem:[%s402 + $0x80] sm:$0xff] %v2679
        %2752 = vst [vmem:[%s402 + $0x88] sm:$0xff] %v2680
        %2753 = vst [vmem:[%s402 + $0x90] sm:$0xff] %v2681
        %2754 = vst [vmem:[%s402 + $0x98] sm:$0xff] %v2682
        %2755 = vst [vmem:[%s402 + $0xa0] sm:$0xff] %v2683
        %2756 = vst [vmem:[%s402 + $0xa8] sm:$0xff] %v2684
        %2757 = vst [vmem:[%s402 + $0xb0] sm:$0xff] %v2685
        %2758 = vst [vmem:[%s402 + $0xb8] sm:$0xff] %v2686
        %2759 = vst [vmem:[%s402 + $0xc0] sm:$0xff] %v2687
        %2760 = vst [vmem:[%s402 + $0xc8] sm:$0xff] %v2688
        %2761 = vst [vmem:[%s402 + $0xd0] sm:$0xff] %v2689
        %2762 = vst [vmem:[%s402 + $0xd8] sm:$0xff] %v2690
        %2763 = vst [vmem:[%s402 + $0xe0] sm:$0xff] %v2691
        %2764 = vst [vmem:[%s402 + $0xe8] sm:$0xff] %v2692
        %2765 = vst [vmem:[%s402 + $0xf0] sm:$0xff] %v2693
        %2766 = vst [vmem:[%s402 + $0xf8] sm:$0xff] %v2694
        %2767 = vst [vmem:[%s402 + $0x100] sm:$0xff] %v2695
        %2768 = vst [vmem:[%s402 + $0x108] sm:$0xff] %v2696
        %2769 = vst [vmem:[%s402 + $0x110] sm:$0xff] %v2697
        %2770 = vst [vmem:[%s402 + $0x118] sm:$0xff] %v2698
        %2771 = vst [vmem:[%s402 + $0x120] sm:$0xff] %v2699
        %2772 = vst [vmem:[%s402 + $0x128] sm:$0xff] %v2700
        %2773 = vst [vmem:[%s402 + $0x130] sm:$0xff] %v2701
        %2774 = vst [vmem:[%s402 + $0x138] sm:$0xff] %v2702
        %2775 = vst [vmem:[%s402 + $0x140] sm:$0xff] %v2703
        %2776 = vst [vmem:[%s402 + $0x148] sm:$0xff] %v2704
        %2777 = vst [vmem:[%s402 + $0x150] sm:$0xff] %v2705
        %2778 = vst [vmem:[%s402 + $0x158] sm:$0xff] %v2706
        %2779 = vst [vmem:[%s402 + $0x160] sm:$0xff] %v2707
        %2780 = vst [vmem:[%s402 + $0x168] sm:$0xff] %v2708
        %2781 = vst [vmem:[%s402 + $0x170] sm:$0xff] %v2709
        %2782 = vst [vmem:[%s402 + $0x178] sm:$0xff] %v2710
        %2783 = vst [vmem:[%s402 + $0x180] sm:$0xff] %v2711
        %2784 = vst [vmem:[%s402 + $0x188] sm:$0xff] %v2712
        %2785 = vst [vmem:[%s402 + $0x190] sm:$0xff] %v2713
        %2786 = vst [vmem:[%s402 + $0x198] sm:$0xff] %v2714
        %2787 = vst [vmem:[%s402 + $0x1a0] sm:$0xff] %v2715
        %2788 = vst [vmem:[%s402 + $0x1a8] sm:$0xff] %v2716
        %2789 = vst [vmem:[%s402 + $0x1b0] sm:$0xff] %v2717
        %2790 = vst [vmem:[%s402 + $0x1b8] sm:$0xff] %v2718
        %2791 = vst [vmem:[%s402 + $0x1c0] sm:$0xff] %v2719
        %2792 = vst [vmem:[%s402 + $0x1c8] sm:$0xff] %v2720
        %2793 = vst [vmem:[%s402 + $0x1d0] sm:$0xff] %v2721
        %2794 = vst [vmem:[%s402 + $0x1d8] sm:$0xff] %v2722
        %2795 = vst [vmem:[%s402 + $0x1e0] sm:$0xff] %v2723
        %2796 = vst [vmem:[%s402 + $0x1e8] sm:$0xff] %v2724
        %2797 = vst [vmem:[%s402 + $0x1f0] sm:$0xff] %v2725
        %2798 = vst [vmem:[%s402 + $0x1f8] sm:$0xff] %v2726
        %2799 = vst [vmem:[%s402 + $0x200] sm:$0xff] %v2727
        %2800 = vst [vmem:[%s402 + $0x208] sm:$0xff] %v2728
        %2801 = vst [vmem:[%s402 + $0x210] sm:$0xff] %v2729
        %2802 = vst [vmem:[%s402 + $0x218] sm:$0xff] %v2730
        %2803 = vst [vmem:[%s402 + $0x220] sm:$0xff] %v2731
        %2804 = vst [vmem:[%s402 + $0x228] sm:$0xff] %v2732
        %2805 = vst [vmem:[%s402 + $0x230] sm:$0xff] %v2733
        %2806 = vst [vmem:[%s402 + $0x238] sm:$0xff] %v2734
        %s2807 = sand.u32 %s196, 1
        %s2808 = scalar_lea.sflag [#allocation4], %s2807
        %s2809 = sand.u32 %s196, 1
        %s2810 = smul.addr %s2809, 576
        %s2811 = scalar_lea.vmem [#allocation11], %s2810
        // Predicated region
        $region65: #{tpu_custom_call.1} parent=43 // pred_check
          %p2812 = pneg %p206
        $region66: #{tpu_custom_call.1} parent=43 // pred_check_branch
          %2814 = sbr.rel (%p2812) target = $region68
        $region67: #{tpu_custom_call.1} parent=43 // pred_region
          %s2815 = smul.u32 24, %s32
          %s2817 = ssub.s32 9216, 9216
          %2818 = vsyncadd %s2808, %s2817
          %s2819 = smul.addr %s2815, 3
          %s2820 = smul.addr %s31, 72
          %s2821 = sadd.s32 %s2819, %s2820
          %s2822 = smul.addr %s2821, 128
          %s2823 = scalar_lea.hbm %s6, %s2822
          %s2824 = sshll.u32 %s2811, 4
          %s2825 = int_to_ptr.vmem [resolvable:$true] %s2824
          %2830 = dma.vmem_to_hbm [thread:$0]  %s2825, 9216, %s2823, %s2808, 128, 128, 8
        $region68: #{tpu_custom_call.1} parent=43 // pred_fallthru
          _
      $region44: #{tpu_custom_call.1} parent=5 // pred_fallthru
        _
      %p2831 = scmp.le.s32.totalorder 2, %s22
      // Predicated region
      $region69: #{tpu_custom_call.1} parent=5 // pred_check
        %p2832 = pneg %p2831
      $region70: #{tpu_custom_call.1} parent=5 // pred_check_branch
        %2834 = sbr.rel (%p2832) target = $region72
      $region71: #{tpu_custom_call.1} parent=5 // pred_region
        %s2835 = ssub.s32 %s22, 2
        // Predicated region
        $region73: #{tpu_custom_call.1} parent=71 // pred_check
          %p2836 = pneg %p212
        $region74: #{tpu_custom_call.1} parent=71 // pred_check_branch
          %2838 = sbr.rel (%p2836) target = $region76
        $region75: #{tpu_custom_call.1} parent=71 // pred_region
          %s2839 = sand.u32 %s197, 1
          %s2840 = scalar_lea.sflag [#allocation4], %s2839
          %s2841 = sand.u32 %s197, 1
          %s2842 = smul.addr %s2841, 576
          %s2843 = scalar_lea.vmem [#allocation11], %s2842
          %2844 = dma.done %s2840, 9216
        $region76: #{tpu_custom_call.1} parent=71 // pred_fallthru
          _
      $region72: #{tpu_custom_call.1} parent=5 // pred_fallthru
        _
    $region6: #{tpu_custom_call.1} parent=1 // loop_footer
      %s26 = sadd.s32 1, %s22
    $region7: #{tpu_custom_call.1} parent=1 // loop_footer_branch
      %21 = sbr.rel target = $region3
    $region8: #{tpu_custom_call.1} parent=1 // loop_exit
      _
    %2845 = vsyncpa [#allocation3], 1
    %s2846 = scalar_lea.sflag [#allocation3], 1
    %2847 = vsyncpa %s2846, 1
    %2848 = vsyncpa [#allocation6], 1
    %s2849 = scalar_lea.sflag [#allocation6], 1
    %2850 = vsyncpa %s2849, 1
    %2851 = vsyncpa [#allocation9], 1
    %2852 = vsyncpa [#allocation4], 1
    %s2853 = scalar_lea.sflag [#allocation4], 1
    %2854 = vsyncpa %s2853, 1

</llo_original>
